<compile_context>
chip_gen: v5e
topology: v5e:2x2
jax: 0.10.0
libtpu: 0.0.40
codegen_flags: <defaults>
</compile_context>

<pallas_src>
import functools

import jax
import jax.numpy as jnp
from jax.experimental import pallas as pl
from jax.experimental.pallas import tpu as pltpu


def _round_up(v, m):
    return ((v + m - 1) // m) * m


def _num_tensorcores():
    """Best-effort detection of 2-TC (v7x) chips; never raises."""
    try:
        kind = (getattr(jax.devices()[0], "device_kind", "") or "").lower()
        if "v7" in kind or "7x" in kind:
            return 2
    except Exception:
        pass
    return 1


def _pick_batch_tile(B, n_cores):
    """Pick the batch tile.

    - Small B (<= 512 rows): one grid step on 1-TC chips (per-step overhead
      dominates); two even steps on 2-TC chips so the parallel axis shards.
    - Large B: tile from {512, 256, 128, 64} minimizing batch padding,
      preferring the largest tile (fills the 256-row MXU on v6e/v7x).
    """
    Bp8 = _round_up(B, 8)
    if Bp8 <= 512:
        if n_cores >= 2 and Bp8 >= 256:
            return _round_up((Bp8 + 1) // 2, 8)   # 2 steps for megacore
        return Bp8                                # single step
    best_tb, best_pad = 512, _round_up(B, 512) - B
    for tb in (256, 128, 64):
        pad = _round_up(B, tb) - B
        if pad < best_pad:
            best_tb, best_pad = tb, pad
    return best_tb


# ---------------------------------------------------------------------------
# Kernel
# ---------------------------------------------------------------------------
def _drift_kernel(mp, x_ref, w0_ref, b_ref, *refs):
    """refs = (w_1, ..., w_{n_lin-1}, out_ref, osc_scratch).

    w0_ref is the fused [W0 | p0] matrix of shape (Hp, Mp + Hp); `mp` is the
    padded MLP width so we know where to split the fused matmul result.
    b_ref packs all biases: row i is the (padded) bias of linear layer i.
    """
    out_ref = refs[-2]
    osc_ref = refs[-1]
    ws = refs[:-2]

    x = x_ref[...]                                            # bf16 (tb, Hp)

    # Fused layer-0 + oscillator matmul: (tb, Hp) @ (Hp, Mp + Hp), f32 acc.
    z = jnp.dot(x, w0_ref[...], preferred_element_type=jnp.float32)

    # Park the oscillator term in VMEM right away so it is not live as a big
    # SSA value across the layer loop (register-pressure at tb = 256-512).
    osc_ref[...] = z[:, mp:]                                  # (tb, Hp) f32

    h = z[:, :mp] + b_ref[0:1, :mp]                           # (tb, Mp) f32
    h = 0.909 * (h * jax.nn.sigmoid(h))                       # LipSwish (f32)

    n_hidden = len(ws)
    for i in range(n_hidden):
        w = ws[i][...]                                        # bf16 weights
        out_dim = w.shape[1]
        h = jnp.dot(h.astype(w.dtype), w, preferred_element_type=jnp.float32)
        h = h + b_ref[i + 1:i + 2, :out_dim]
        if i < n_hidden - 1:
            h = 0.909 * (h * jax.nn.sigmoid(h))
    h = jnp.tanh(h)                                           # tanh=True

    out_ref[...] = (osc_ref[...] + h).astype(out_ref.dtype)


# ---------------------------------------------------------------------------
# One-time parameter packing (hoisted out of the per-step drift call)
# ---------------------------------------------------------------------------
def pack_drift_params(p0, weights, biases):
    """Pads / packs / casts parameters ONCE.  Reuse the result every SDE step."""
    H = weights[0].shape[0]
    M = weights[0].shape[1]
    n_lin = len(weights)
    Hp = _round_up(H, 128)
    Mp = _round_up(M, 128)
    max_outp = max(Mp, Hp)

    def pad2(a, rows, cols):
        return jnp.pad(a, ((0, rows - a.shape[0]), (0, cols - a.shape[1])))

    # bf16 MXU operands (f32 accumulation happens in the MXU); f32 biases.
    w0_packed = jnp.concatenate(
        [pad2(weights[0], Hp, Mp), pad2(p0, Hp, Hp)], axis=1
    ).astype(jnp.bfloat16)                                    # (Hp, Mp + Hp)

    # All biases packed into one (n_lin, max_outp) f32 array.
    b_all = jnp.zeros((n_lin, max_outp), jnp.float32)
    for i, b in enumerate(biases):
        b_all = b_all.at[i, :b.shape[1]].set(b[0].astype(jnp.float32))

    w_hidden = []
    for idx in range(1, n_lin):
        out_dim = Hp if idx == n_lin - 1 else Mp
        w_hidden.append(pad2(weights[idx], Mp, out_dim).astype(jnp.bfloat16))

    return {
        "H": H, "M": M, "Hp": Hp, "Mp": Mp, "n_lin": n_lin,
        "w0_packed": w0_packed, "b_all": b_all, "w_hidden": tuple(w_hidden),
    }


def pad_state(x, packed, batch_tile):
    """Pad the SDE state to the (Bp, Hp) bf16 layout (do this once per loop)."""
    B, H = x.shape
    assert H == packed["H"]
    Bp = _round_up(B, batch_tile)
    return jnp.pad(x, ((0, Bp - B), (0, packed["Hp"] - H))).astype(jnp.bfloat16)


def unpad_state(x_p, B, H, dtype=jnp.float32):
    return x_p[:B, :H].astype(dtype)


# ---------------------------------------------------------------------------
# Forward passes
# ---------------------------------------------------------------------------
def drift_forward_padded(x_p, packed, batch_tile):
    """x_p: (Bp, Hp) bf16 padded state.  Returns (Bp, Hp) bf16."""
    Bp, Hp = x_p.shape
    Mp = packed["Mp"]
    n_lin = packed["n_lin"]
    tb = batch_tile
    assert Hp == packed["Hp"] and Bp % tb == 0

    wb_args = [packed["w0_packed"], packed["b_all"], *packed["w_hidden"]]

    # --- specs: x/out tiled over batch; weights/biases full every step ---
    in_specs = [pl.BlockSpec((tb, Hp), lambda i: (i, 0))]
    for a in wb_args:
        in_specs.append(pl.BlockSpec(a.shape, lambda i: (0, 0)))
    out_spec = pl.BlockSpec((tb, Hp), lambda i: (i, 0))

    # --- VMEM budget (fits v7x's 64 MiB): double-buffered tiles/params plus
    #     f32 activation + oscillator-scratch headroom.
    param_bytes = sum(int(a.size) * a.dtype.itemsize for a in wb_args)
    tile_bytes = tb * Hp * (2 + 2)                            # bf16 in + out
    act_bytes = 2 * tb * (Mp + Hp) * 4                        # f32 temporaries
    scratch_bytes = tb * Hp * 4                               # osc f32 scratch
    vmem_bytes = int(min(2 * (param_bytes + tile_bytes) + act_bytes
                         + scratch_bytes + (4 << 20),
                         64 * 1024 * 1024))

    # --- scheduler hint ---
    L = n_lin - 1                                             # num_layers
    flops = 2 * Bp * (Hp * (Mp + Hp) + max(0, L - 1) * Mp * Mp + Mp * Hp)
    transcendentals = Bp * (L * Mp + Hp)
    bytes_accessed = int(x_p.size) * 2 + Bp * Hp * 2 + param_bytes
    cost = pl.CostEstimate(flops=flops, transcendentals=transcendentals,
                           bytes_accessed=bytes_accessed)

    kernel = functools.partial(_drift_kernel, Mp)

    return pl.pallas_call(
        kernel,
        out_shape=jax.ShapeDtypeStruct((Bp, Hp), jnp.bfloat16),
        grid_spec=pltpu.PrefetchScalarGridSpec(
            num_scalar_prefetch=0,
            grid=(Bp // tb,),
            in_specs=in_specs,
            out_specs=out_spec,
            scratch_shapes=[pltpu.VMEM((tb, Hp), jnp.float32)],
        ),
        compiler_params=pltpu.CompilerParams(
            dimension_semantics=("parallel",),
            vmem_limit_bytes=vmem_bytes,
        ),
        cost_estimate=cost,
    )(x_p, *wb_args)


def drift_forward(x, packed, *, batch_tile=None):
    """One-shot convenience wrapper: pad -> kernel -> slice.

    Inside an SDE loop, call pad_state() once before the loop and
    drift_forward_padded() per step instead.
    """
    B, H = x.shape
    tb = batch_tile if batch_tile is not None else _pick_batch_tile(
        B, _num_tensorcores())
    tb = max(8, (tb // 8) * 8)
    x_p = pad_state(x, packed, tb)
    out_p = drift_forward_padded(x_p, packed, tb)
    return unpad_state(out_p, B, H, dtype=x.dtype)


# ---------------------------------------------------------------------------
# Synthetic params + pure-JAX reference
# ---------------------------------------------------------------------------
def init_drift_params(key, hidden_size, mlp_size, num_layers):
    """Deterministic synthetic parameters matching the module's shapes."""
    sizes = [(hidden_size, mlp_size)]
    sizes += [(mlp_size, mlp_size)] * (num_layers - 1)
    sizes += [(mlp_size, hidden_size)]

    weights, biases = [], []
    for (fin, fout) in sizes:
        key, kw, kb = jax.random.split(key, 3)
        bound = 1.0 / jnp.sqrt(fin)
        # stored as (in, out), i.e. transpose of PyTorch's (out, in)
        weights.append(jax.random.uniform(kw, (fin, fout), jnp.float32,
                                          -bound, bound))
        biases.append(jax.random.uniform(kb, (1, fout), jnp.float32,
                                         -bound, bound))
    key, kp = jax.random.split(key)
    p0 = 0.1 * jax.random.normal(kp, (hidden_size, hidden_size), jnp.float32)
    return p0, weights, biases


def drift_reference(x, p0, weights, biases):
    """Pure-JAX f32 reference of the same forward pass."""
    h = x.astype(jnp.float32)
    n = len(weights)
    for i, (w, b) in enumerate(zip(weights, biases)):
        h = h @ w + b
        if i < n - 1:
            h = 0.909 * (h * jax.nn.sigmoid(h))
    h = jnp.tanh(h)
    return (x.astype(jnp.float32) @ p0 + h).astype(x.dtype)


if __name__ == "__main__":
    # Small shapes consistent with the module.
    batch, hidden_size, mlp_size, num_layers = 256, 32, 64, 2

    key = jax.random.PRNGKey(0)
    key, kx = jax.random.split(key)
    x = jax.random.normal(kx, (batch, hidden_size), jnp.float32)
    p0, weights, biases = init_drift_params(key, hidden_size, mlp_size,
                                            num_layers)

    # Pack parameters ONCE (hoisted out of the per-step drift evaluation).
    packed = pack_drift_params(p0, weights, biases)

    out = drift_forward(x, packed)
    out = jax.block_until_ready(out)

    ref = drift_reference(x, p0, weights, biases)
    assert out.shape == (batch, hidden_size)
    # bf16 MXU operands / bf16-carried state with f32 accumulation ->
    # loosened tolerance vs f32 reference.
    assert jnp.allclose(out, ref, atol=3e-2, rtol=3e-2), "mismatch vs reference"

    print("KERNEL_OK")
</pallas_src>

<mosaic_0001>
module attributes {stable_mosaic.version = 11 : i64} {
  func.func @_drift_kernel(%arg0: i32, %arg1: memref<256x128xbf16, #tpu.memory_space<vmem>>, %arg2: memref<128x256xbf16, #tpu.memory_space<vmem>>, %arg3: memref<3x128xf32, #tpu.memory_space<vmem>>, %arg4: memref<128x128xbf16, #tpu.memory_space<vmem>>, %arg5: memref<128x128xbf16, #tpu.memory_space<vmem>>, %arg6: memref<256x128xbf16, #tpu.memory_space<vmem>>, %arg7: memref<256x128xf32, #tpu.memory_space<vmem>>) attributes {dimension_semantics = [#tpu.dimension_semantics<parallel>], iteration_bounds = array<i64: 1>, scalar_prefetch = 0 : i64, scratch_operands = 1 : i64, tpu.core_type = #tpu.core_type<tc>, window_params = [{transform_indices = @transform_0, window_bounds = array<i64: 256, 128>}, {pipeline_mode = #tpu.pipeline_mode<synchronous>, transform_indices = @transform_1, window_bounds = array<i64: 128, 256>}, {pipeline_mode = #tpu.pipeline_mode<synchronous>, transform_indices = @transform_2, window_bounds = array<i64: 3, 128>}, {pipeline_mode = #tpu.pipeline_mode<synchronous>, transform_indices = @transform_3, window_bounds = array<i64: 128, 128>}, {pipeline_mode = #tpu.pipeline_mode<synchronous>, transform_indices = @transform_4, window_bounds = array<i64: 128, 128>}, {transform_indices = @transform_5, window_bounds = array<i64: 256, 128>}]} {
    %c0 = arith.constant 0 : index
    %c0_0 = arith.constant 0 : index
    %0 = vector.load %arg1[%c0, %c0_0] : memref<256x128xbf16, #tpu.memory_space<vmem>>, vector<256x128xbf16>
    %c0_1 = arith.constant 0 : index
    %c0_2 = arith.constant 0 : index
    %1 = vector.load %arg2[%c0_1, %c0_2] : memref<128x256xbf16, #tpu.memory_space<vmem>>, vector<128x256xbf16>
    %cst = arith.constant dense<0.000000e+00> : vector<256x256xf32>
    %2 = tpu.matmul %0, %1, %cst {dimension_numbers = #tpu.dot_dimension_numbers<[1], [0], [0], [1], [0, 0, 1, 1], [], []>} : vector<256x128xbf16>, vector<128x256xbf16>, vector<256x256xf32> -> vector<256x256xf32>
    %3 = vector.extract_strided_slice %2 {offsets = [0, 128], sizes = [256, 128], strides = [1, 1]} : vector<256x256xf32> to vector<256x128xf32>
    %c0_3 = arith.constant 0 : index
    %c0_4 = arith.constant 0 : index
    %4 = vector.load %arg7[%c0_3, %c0_4] : memref<256x128xf32, #tpu.memory_space<vmem>>, vector<256x128xf32>
    tpu.vector_store %arg7[%c0_3, %c0_4], %3 {strides = array<i32>} : memref<256x128xf32, #tpu.memory_space<vmem>>, vector<256x128xf32>,
    %5 = vector.extract_strided_slice %2 {offsets = [0, 0], sizes = [256, 128], strides = [1, 1]} : vector<256x256xf32> to vector<256x128xf32>
    %c0_5 = arith.constant 0 : index
    %c0_6 = arith.constant 0 : index
    %6 = vector.load %arg3[%c0_5, %c0_6] : memref<3x128xf32, #tpu.memory_space<vmem>>, vector<1x128xf32>
    %7 = vector.broadcast %6 : vector<1x128xf32> to vector<256x128xf32>
    %8 = arith.addf %5, %7 : vector<256x128xf32>
    %9 = arith.negf %8 : vector<256x128xf32>
    %10 = math.exp %9 : vector<256x128xf32>
    %cst_7 = arith.constant 1.000000e+00 : f32
    %11 = vector.broadcast %cst_7 : f32 to vector<256x128xf32>
    %12 = arith.addf %11, %10 : vector<256x128xf32>
    %13 = arith.divf %11, %12 : vector<256x128xf32>
    %14 = arith.mulf %8, %13 : vector<256x128xf32>
    %cst_8 = arith.constant 0.908999979 : f32
    %15 = vector.broadcast %cst_8 : f32 to vector<256x128xf32>
    %16 = arith.mulf %15, %14 : vector<256x128xf32>
    %c0_9 = arith.constant 0 : index
    %c0_10 = arith.constant 0 : index
    %17 = vector.load %arg4[%c0_9, %c0_10] : memref<128x128xbf16, #tpu.memory_space<vmem>>, vector<128x128xbf16>
    %18 = arith.truncf %16 : vector<256x128xf32> to vector<256x128xbf16>
    %cst_11 = arith.constant dense<0.000000e+00> : vector<256x128xf32>
    %19 = tpu.matmul %18, %17, %cst_11 {dimension_numbers = #tpu.dot_dimension_numbers<[1], [0], [0], [1], [0, 0, 1, 1], [], []>} : vector<256x128xbf16>, vector<128x128xbf16>, vector<256x128xf32> -> vector<256x128xf32>
    %c1 = arith.constant 1 : index
    %c0_12 = arith.constant 0 : index
    %20 = vector.load %arg3[%c1, %c0_12] : memref<3x128xf32, #tpu.memory_space<vmem>>, vector<1x128xf32>
    %21 = vector.broadcast %20 : vector<1x128xf32> to vector<256x128xf32>
    %22 = arith.addf %19, %21 : vector<256x128xf32>
    %23 = arith.negf %22 : vector<256x128xf32>
    %24 = math.exp %23 : vector<256x128xf32>
    %cst_13 = arith.constant 1.000000e+00 : f32
    %25 = vector.broadcast %cst_13 : f32 to vector<256x128xf32>
    %26 = arith.addf %25, %24 : vector<256x128xf32>
    %27 = arith.divf %25, %26 : vector<256x128xf32>
    %28 = arith.mulf %22, %27 : vector<256x128xf32>
    %cst_14 = arith.constant 0.908999979 : f32
    %29 = vector.broadcast %cst_14 : f32 to vector<256x128xf32>
    %30 = arith.mulf %29, %28 : vector<256x128xf32>
    %c0_15 = arith.constant 0 : index
    %c0_16 = arith.constant 0 : index
    %31 = vector.load %arg5[%c0_15, %c0_16] : memref<128x128xbf16, #tpu.memory_space<vmem>>, vector<128x128xbf16>
    %32 = arith.truncf %30 : vector<256x128xf32> to vector<256x128xbf16>
    %cst_17 = arith.constant dense<0.000000e+00> : vector<256x128xf32>
    %33 = tpu.matmul %32, %31, %cst_17 {dimension_numbers = #tpu.dot_dimension_numbers<[1], [0], [0], [1], [0, 0, 1, 1], [], []>} : vector<256x128xbf16>, vector<128x128xbf16>, vector<256x128xf32> -> vector<256x128xf32>
    %c2 = arith.constant 2 : index
    %c0_18 = arith.constant 0 : index
    %34 = vector.load %arg3[%c2, %c0_18] : memref<3x128xf32, #tpu.memory_space<vmem>>, vector<1x128xf32>
    %35 = vector.broadcast %34 : vector<1x128xf32> to vector<256x128xf32>
    %36 = arith.addf %33, %35 : vector<256x128xf32>
    %37 = math.tanh %36 : vector<256x128xf32>
    %c0_19 = arith.constant 0 : index
    %c0_20 = arith.constant 0 : index
    %38 = vector.load %arg7[%c0_19, %c0_20] : memref<256x128xf32, #tpu.memory_space<vmem>>, vector<256x128xf32>
    %39 = arith.addf %38, %37 : vector<256x128xf32>
    %40 = arith.truncf %39 : vector<256x128xf32> to vector<256x128xbf16>
    %c0_21 = arith.constant 0 : index
    %c0_22 = arith.constant 0 : index
    %41 = vector.load %arg6[%c0_21, %c0_22] : memref<256x128xbf16, #tpu.memory_space<vmem>>, vector<256x128xbf16>
    tpu.vector_store %arg6[%c0_21, %c0_22], %40 {strides = array<i32>} : memref<256x128xbf16, #tpu.memory_space<vmem>>, vector<256x128xbf16>,
    return
  }
  func.func @transform_0(%arg0: i32) -> (i32, i32) {
    %c0_i32 = arith.constant 0 : i32
    %c0_i32_0 = arith.constant 0 : i32
    return %arg0, %c0_i32 : i32, i32
  }
  func.func @transform_1(%arg0: i32) -> (i32, i32) {
    %c0_i32 = arith.constant 0 : i32
    %c0_i32_0 = arith.constant 0 : i32
    %c0_i32_1 = arith.constant 0 : i32
    return %c0_i32, %c0_i32_0 : i32, i32
  }
  func.func @transform_2(%arg0: i32) -> (i32, i32) {
    %c0_i32 = arith.constant 0 : i32
    %c0_i32_0 = arith.constant 0 : i32
    %c0_i32_1 = arith.constant 0 : i32
    return %c0_i32, %c0_i32_0 : i32, i32
  }
  func.func @transform_3(%arg0: i32) -> (i32, i32) {
    %c0_i32 = arith.constant 0 : i32
    %c0_i32_0 = arith.constant 0 : i32
    %c0_i32_1 = arith.constant 0 : i32
    return %c0_i32, %c0_i32_0 : i32, i32
  }
  func.func @transform_4(%arg0: i32) -> (i32, i32) {
    %c0_i32 = arith.constant 0 : i32
    %c0_i32_0 = arith.constant 0 : i32
    %c0_i32_1 = arith.constant 0 : i32
    return %c0_i32, %c0_i32_0 : i32, i32
  }
  func.func @transform_5(%arg0: i32) -> (i32, i32) {
    %c0_i32 = arith.constant 0 : i32
    %c0_i32_0 = arith.constant 0 : i32
    return %arg0, %c0_i32 : i32, i32
  }
}

</mosaic_0001>

<llo_original>
// kernel: tpu_custom_call.1
$region0: #{tpu_custom_call.1}
  #allocation0 [shape = 'u32[]', space=smem, size = 0x4, offset = 0x4, fixed_abs, tag = 'smem constant byte address 0x4 - core index']
  #allocation1 [shape = 'u32[72,128]{1,0:T(1,128)}', space=vmem, size = 0x9000, scoped, tag = 'internal scratch']
  #allocation2 [shape = 'f32[256,128]{1,0:T(8,128)}', space=vmem, size = 0x20000, scoped, tag = 'scratch operand']
  %s0 = inlined_call_operand.hbm [shape: bf16[256,128], index: 0, kind: input, shape index: {}]
  %s1 = inlined_call_operand.hbm [shape: bf16[128,256], index: 1, kind: input, shape index: {}]
  %s2 = inlined_call_operand.hbm [shape: f32[3,128], index: 2, kind: input, shape index: {}]
  %s3 = inlined_call_operand.hbm [shape: bf16[128,128], index: 3, kind: input, shape index: {}]
  %s4 = inlined_call_operand.hbm [shape: bf16[128,128], index: 4, kind: input, shape index: {}]
  %s5 = inlined_call_operand.hbm [shape: bf16[256,128], index: 5, kind: output, shape index: {}]
  %s6 = sld [smem:[#allocation0]]
  $region50: #{tpu_custom_call.1} parent=0
    _
  %s8 = ssub.s32 1, %s6
  %s9 = scalar_select 0, %s8, %s6
  $region1: #{tpu_custom_call.1} parent=0
    #allocation3 [shape = 'u8[65536]{0}', space=vmem, size = 0x10000, scoped, tag = 'input window, operand 0, single buffered']
    #allocation4 [shape = 's32[1]{0}', space=sflag, size = 0x4, scoped, tag = 'scoped memory for tpu_custom_call.1']
    #allocation5 [shape = 's32[1]{0}', space=sflag, size = 0x4, scoped, tag = 'scoped memory for tpu_custom_call.1']
    #allocation6 [shape = 'u8[65536]{0}', space=vmem, size = 0x10000, scoped, tag = 'input window, operand 1, single buffered']
    #allocation7 [shape = 's32[1]{0}', space=sflag, size = 0x4, scoped, tag = 'scoped memory for tpu_custom_call.1']
    #allocation8 [shape = 'u8[2048]{0}', space=vmem, size = 0x800, scoped, tag = 'input window, operand 2, single buffered']
    #allocation9 [shape = 'u8[32768]{0}', space=vmem, size = 0x8000, scoped, tag = 'input window, operand 3, single buffered']
    #allocation10 [shape = 's32[1]{0}', space=sflag, size = 0x4, scoped, tag = 'scoped memory for tpu_custom_call.1']
    #allocation11 [shape = 'u8[32768]{0}', space=vmem, size = 0x8000, scoped, tag = 'input window, operand 4, single buffered']
    #allocation12 [shape = 'u8[65536]{0}', space=vmem, size = 0x10000, scoped, tag = 'output window, operand 0, single buffered']
    %10 = vsyncpa [#allocation4], 0
    %11 = vsyncpa [#allocation7], 0
    %12 = vsyncpa [#allocation10], 0
    %13 = vsyncpa [#allocation5], 0
    // Predicated region
    $region2: #{tpu_custom_call.1} parent=1 // pred_check
      _
    $region3: #{tpu_custom_call.1} parent=1 // pred_check_branch
      %15 = sbr.rel (0) target = $region5
    $region4: #{tpu_custom_call.1} parent=1 // pred_region
      %17 = vsyncadd [#allocation4], 0
      %s18 = sshll.u32 %s0, 4
      %s19 = int_to_ptr.hbm [resolvable:$true] %s18
      %s20 = sshll.u32 [#allocation3], 4
      %s21 = int_to_ptr.vmem [resolvable:$true] %s20
      %26 = dma.hbm_to_vmem [thread:$0]  %s19, 2048, %s21, [#allocation4], 64, 64, 4
    $region5: #{tpu_custom_call.1} parent=1 // pred_fallthru
      _
    // Predicated region
    $region6: #{tpu_custom_call.1} parent=1 // pred_check
      _
    $region7: #{tpu_custom_call.1} parent=1 // pred_check_branch
      %28 = sbr.rel (0) target = $region9
    $region8: #{tpu_custom_call.1} parent=1 // pred_region
      %30 = vsyncadd [#allocation7], 0
      %s31 = sshll.u32 %s1, 4
      %s32 = int_to_ptr.hbm [resolvable:$true] %s31
      %s33 = sshll.u32 [#allocation6], 4
      %s34 = int_to_ptr.vmem [resolvable:$true] %s33
      %39 = dma.hbm_to_vmem [thread:$0]  %s32, 2048, %s34, [#allocation7], 128, 128, 8
    $region9: #{tpu_custom_call.1} parent=1 // pred_fallthru
      _
    // Predicated region
    $region10: #{tpu_custom_call.1} parent=1 // pred_check
      _
    $region11: #{tpu_custom_call.1} parent=1 // pred_check_branch
      %41 = sbr.rel (0) target = $region13
    $region12: #{tpu_custom_call.1} parent=1 // pred_region
      %43 = vsyncadd [#allocation7], 0
      %s45 = sshll.u32 %s2, 4
      %s46 = int_to_ptr.hbm [resolvable:$true] %s45
      %s47 = sshll.u32 [#allocation8], 4
      %s48 = int_to_ptr.vmem [resolvable:$true] %s47
      %50 = dma.hbm_to_vmem [thread:$0]  %s46, 64, %s48, [#allocation7]
    $region13: #{tpu_custom_call.1} parent=1 // pred_fallthru
      _
    // Predicated region
    $region14: #{tpu_custom_call.1} parent=1 // pred_check
      _
    $region15: #{tpu_custom_call.1} parent=1 // pred_check_branch
      %52 = sbr.rel (0) target = $region17
    $region16: #{tpu_custom_call.1} parent=1 // pred_region
      %54 = vsyncadd [#allocation10], 0
      %s55 = sshll.u32 %s3, 4
      %s56 = int_to_ptr.hbm [resolvable:$true] %s55
      %s57 = sshll.u32 [#allocation9], 4
      %s58 = int_to_ptr.vmem [resolvable:$true] %s57
      %63 = dma.hbm_to_vmem [thread:$0]  %s56, 1024, %s58, [#allocation10], 64, 64, 4
    $region17: #{tpu_custom_call.1} parent=1 // pred_fallthru
      _
    // Predicated region
    $region18: #{tpu_custom_call.1} parent=1 // pred_check
      _
    $region19: #{tpu_custom_call.1} parent=1 // pred_check_branch
      %65 = sbr.rel (0) target = $region21
    $region20: #{tpu_custom_call.1} parent=1 // pred_region
      %67 = vsyncadd [#allocation10], 0
      %s68 = sshll.u32 %s4, 4
      %s69 = int_to_ptr.hbm [resolvable:$true] %s68
      %s70 = sshll.u32 [#allocation11], 4
      %s71 = int_to_ptr.vmem [resolvable:$true] %s70
      %76 = dma.hbm_to_vmem [thread:$0]  %s69, 1024, %s71, [#allocation10], 64, 64, 4
    $region21: #{tpu_custom_call.1} parent=1 // pred_fallthru
      _
    // Predicated region
    $region22: #{tpu_custom_call.1} parent=1 // pred_check
      _
    $region23: #{tpu_custom_call.1} parent=1 // pred_check_branch
      %78 = sbr.rel (0) target = $region25
    $region24: #{tpu_custom_call.1} parent=1 // pred_region
      %80 = dma.done [#allocation4], 2048
    $region25: #{tpu_custom_call.1} parent=1 // pred_fallthru
      _
    // Predicated region
    $region26: #{tpu_custom_call.1} parent=1 // pred_check
      _
    $region27: #{tpu_custom_call.1} parent=1 // pred_check_branch
      %82 = sbr.rel (0) target = $region29
    $region28: #{tpu_custom_call.1} parent=1 // pred_region
      %84 = dma.done [#allocation7], 2048
    $region29: #{tpu_custom_call.1} parent=1 // pred_fallthru
      _
    // Predicated region
    $region30: #{tpu_custom_call.1} parent=1 // pred_check
      _
    $region31: #{tpu_custom_call.1} parent=1 // pred_check_branch
      %86 = sbr.rel (0) target = $region33
    $region32: #{tpu_custom_call.1} parent=1 // pred_region
      %88 = dma.done [#allocation7], 64
    $region33: #{tpu_custom_call.1} parent=1 // pred_fallthru
      _
    // Predicated region
    $region34: #{tpu_custom_call.1} parent=1 // pred_check
      _
    $region35: #{tpu_custom_call.1} parent=1 // pred_check_branch
      %90 = sbr.rel (0) target = $region37
    $region36: #{tpu_custom_call.1} parent=1 // pred_region
      %92 = dma.done [#allocation10], 1024
    $region37: #{tpu_custom_call.1} parent=1 // pred_fallthru
      _
    // Predicated region
    $region38: #{tpu_custom_call.1} parent=1 // pred_check
      _
    $region39: #{tpu_custom_call.1} parent=1 // pred_check_branch
      %94 = sbr.rel (0) target = $region41
    $region40: #{tpu_custom_call.1} parent=1 // pred_region
      %96 = dma.done [#allocation10], 1024
    $region41: #{tpu_custom_call.1} parent=1 // pred_fallthru
      _
    %v97 = vld [vmem:[#allocation3] sm:$0xf]
    %v98 = vld [vmem:[#allocation3 + $0x4] sm:$0xf]
    %v99 = vld [vmem:[#allocation3 + $0x8] sm:$0xf]
    %v100 = vld [vmem:[#allocation3 + $0xc] sm:$0xf]
    %v101 = vld [vmem:[#allocation3 + $0x10] sm:$0xf]
    %v102 = vld [vmem:[#allocation3 + $0x14] sm:$0xf]
    %v103 = vld [vmem:[#allocation3 + $0x18] sm:$0xf]
    %v104 = vld [vmem:[#allocation3 + $0x1c] sm:$0xf]
    %v105 = vld [vmem:[#allocation3 + $0x20] sm:$0xf]
    %v106 = vld [vmem:[#allocation3 + $0x24] sm:$0xf]
    %v107 = vld [vmem:[#allocation3 + $0x28] sm:$0xf]
    %v108 = vld [vmem:[#allocation3 + $0x2c] sm:$0xf]
    %v109 = vld [vmem:[#allocation3 + $0x30] sm:$0xf]
    %v110 = vld [vmem:[#allocation3 + $0x34] sm:$0xf]
    %v111 = vld [vmem:[#allocation3 + $0x38] sm:$0xf]
    %v112 = vld [vmem:[#allocation3 + $0x3c] sm:$0xf]
    %v113 = vld [vmem:[#allocation3 + $0x40] sm:$0xf]
    %v114 = vld [vmem:[#allocation3 + $0x44] sm:$0xf]
    %v115 = vld [vmem:[#allocation3 + $0x48] sm:$0xf]
    %v116 = vld [vmem:[#allocation3 + $0x4c] sm:$0xf]
    %v117 = vld [vmem:[#allocation3 + $0x50] sm:$0xf]
    %v118 = vld [vmem:[#allocation3 + $0x54] sm:$0xf]
    %v119 = vld [vmem:[#allocation3 + $0x58] sm:$0xf]
    %v120 = vld [vmem:[#allocation3 + $0x5c] sm:$0xf]
    %v121 = vld [vmem:[#allocation3 + $0x60] sm:$0xf]
    %v122 = vld [vmem:[#allocation3 + $0x64] sm:$0xf]
    %v123 = vld [vmem:[#allocation3 + $0x68] sm:$0xf]
    %v124 = vld [vmem:[#allocation3 + $0x6c] sm:$0xf]
    %v125 = vld [vmem:[#allocation3 + $0x70] sm:$0xf]
    %v126 = vld [vmem:[#allocation3 + $0x74] sm:$0xf]
    %v127 = vld [vmem:[#allocation3 + $0x78] sm:$0xf]
    %v128 = vld [vmem:[#allocation3 + $0x7c] sm:$0xf]
    %v129 = vld [vmem:[#allocation6] sm:$0xff]
    %v130 = vld [vmem:[#allocation6 + $0x8] sm:$0xff]
    %v131 = vld [vmem:[#allocation6 + $0x10] sm:$0xff]
    %v132 = vld [vmem:[#allocation6 + $0x18] sm:$0xff]
    %v133 = vld [vmem:[#allocation6 + $0x20] sm:$0xff]
    %v134 = vld [vmem:[#allocation6 + $0x28] sm:$0xff]
    %v135 = vld [vmem:[#allocation6 + $0x30] sm:$0xff]
    %v136 = vld [vmem:[#allocation6 + $0x38] sm:$0xff]
    %v137 = vld [vmem:[#allocation6 + $0x40] sm:$0xff]
    %v138 = vld [vmem:[#allocation6 + $0x48] sm:$0xff]
    %v139 = vld [vmem:[#allocation6 + $0x50] sm:$0xff]
    %v140 = vld [vmem:[#allocation6 + $0x58] sm:$0xff]
    %v141 = vld [vmem:[#allocation6 + $0x60] sm:$0xff]
    %v142 = vld [vmem:[#allocation6 + $0x68] sm:$0xff]
    %v143 = vld [vmem:[#allocation6 + $0x70] sm:$0xff]
    %v144 = vld [vmem:[#allocation6 + $0x78] sm:$0xff]
    %v177 = vunpack.c.l.b16 %v97
    %v178 = vunpack.c.l.b16 %v98
    %v179 = vunpack.c.l.b16 %v99
    %v180 = vunpack.c.l.b16 %v100
    %v181 = vunpack.c.l.b16 %v101
    %v182 = vunpack.c.l.b16 %v102
    %v183 = vunpack.c.l.b16 %v103
    %v184 = vunpack.c.l.b16 %v104
    %v185 = vunpack.c.l.b16 %v105
    %v186 = vunpack.c.l.b16 %v106
    %v187 = vunpack.c.l.b16 %v107
    %v188 = vunpack.c.l.b16 %v108
    %v189 = vunpack.c.l.b16 %v109
    %v190 = vunpack.c.l.b16 %v110
    %v191 = vunpack.c.l.b16 %v111
    %v192 = vunpack.c.l.b16 %v112
    %v193 = vunpack.c.l.b16 %v113
    %v194 = vunpack.c.l.b16 %v114
    %v195 = vunpack.c.l.b16 %v115
    %v196 = vunpack.c.l.b16 %v116
    %v197 = vunpack.c.l.b16 %v117
    %v198 = vunpack.c.l.b16 %v118
    %v199 = vunpack.c.l.b16 %v119
    %v200 = vunpack.c.l.b16 %v120
    %v201 = vunpack.c.l.b16 %v121
    %v202 = vunpack.c.l.b16 %v122
    %v203 = vunpack.c.l.b16 %v123
    %v204 = vunpack.c.l.b16 %v124
    %v205 = vunpack.c.l.b16 %v125
    %v206 = vunpack.c.l.b16 %v126
    %v207 = vunpack.c.l.b16 %v127
    %v208 = vunpack.c.l.b16 %v128
    %v209 = vpack.c.b16 %v178, %v177
    %v210 = vpack.c.b16 %v180, %v179
    %v211 = vpack.c.b16 %v182, %v181
    %v212 = vpack.c.b16 %v184, %v183
    %v213 = vpack.c.b16 %v186, %v185
    %v214 = vpack.c.b16 %v188, %v187
    %v215 = vpack.c.b16 %v190, %v189
    %v216 = vpack.c.b16 %v192, %v191
    %v217 = vpack.c.b16 %v194, %v193
    %v218 = vpack.c.b16 %v196, %v195
    %v219 = vpack.c.b16 %v198, %v197
    %v220 = vpack.c.b16 %v200, %v199
    %v221 = vpack.c.b16 %v202, %v201
    %v222 = vpack.c.b16 %v204, %v203
    %v223 = vpack.c.b16 %v206, %v205
    %v224 = vpack.c.b16 %v208, %v207
    %v257 = vunpack.c.l.b16 %v129
    %v258 = vunpack.c.h.b16 %v129
    %v259 = vunpack.c.l.b16 %v130
    %v260 = vunpack.c.h.b16 %v130
    %v261 = vunpack.c.l.b16 %v131
    %v262 = vunpack.c.h.b16 %v131
    %v263 = vunpack.c.l.b16 %v132
    %v264 = vunpack.c.h.b16 %v132
    %v265 = vunpack.c.l.b16 %v133
    %v266 = vunpack.c.h.b16 %v133
    %v267 = vunpack.c.l.b16 %v134
    %v268 = vunpack.c.h.b16 %v134
    %v269 = vunpack.c.l.b16 %v135
    %v270 = vunpack.c.h.b16 %v135
    %v271 = vunpack.c.l.b16 %v136
    %v272 = vunpack.c.h.b16 %v136
    %v273 = vunpack.c.l.b16 %v137
    %v274 = vunpack.c.h.b16 %v137
    %v275 = vunpack.c.l.b16 %v138
    %v276 = vunpack.c.h.b16 %v138
    %v277 = vunpack.c.l.b16 %v139
    %v278 = vunpack.c.h.b16 %v139
    %v279 = vunpack.c.l.b16 %v140
    %v280 = vunpack.c.h.b16 %v140
    %v281 = vunpack.c.l.b16 %v141
    %v282 = vunpack.c.h.b16 %v141
    %v283 = vunpack.c.l.b16 %v142
    %v284 = vunpack.c.h.b16 %v142
    %v285 = vunpack.c.l.b16 %v143
    %v286 = vunpack.c.h.b16 %v143
    %v287 = vunpack.c.l.b16 %v144
    %v288 = vunpack.c.h.b16 %v144
    %v289 = vpack.c.b16 %v259, %v257
    %v290 = vpack.c.b16 %v260, %v258
    %v291 = vpack.c.b16 %v263, %v261
    %v292 = vpack.c.b16 %v264, %v262
    %v293 = vpack.c.b16 %v267, %v265
    %v294 = vpack.c.b16 %v268, %v266
    %v295 = vpack.c.b16 %v271, %v269
    %v296 = vpack.c.b16 %v272, %v270
    %v297 = vpack.c.b16 %v275, %v273
    %v298 = vpack.c.b16 %v276, %v274
    %v299 = vpack.c.b16 %v279, %v277
    %v300 = vpack.c.b16 %v280, %v278
    %v301 = vpack.c.b16 %v283, %v281
    %v302 = vpack.c.b16 %v284, %v282
    %v303 = vpack.c.b16 %v287, %v285
    %v304 = vpack.c.b16 %v288, %v286
    %321 = vmatpush.bf16.msra.mxu0 %v303
    %322 = vmatpush.bf16.msra.mxu0 %v301
    %323 = vmatpush.bf16.msra.mxu0 %v299
    %324 = vmatpush.bf16.msra.mxu0 %v297
    %325 = vmatpush.bf16.msra.mxu0 %v295
    %326 = vmatpush.bf16.msra.mxu0 %v293
    %327 = vmatpush.bf16.msra.mxu0 %v291
    %328 = vmatpush.bf16.msra.mxu0 %v289
    %329 = vmatmul.bf16.gmra.mxu0 %v209
    %v330 = vpop.f32.mrf.mxu0
    %v331 = vadd.f32 0.0, %v330
    %v332 = vpop.f32.mrf.mxu0
    %v333 = vadd.f32 0.0, %v332
    %334 = vmatmul.bf16.gmra.mxu0 %v210
    %v335 = vpop.f32.mrf.mxu0
    %v336 = vadd.f32 0.0, %v335
    %v337 = vpop.f32.mrf.mxu0
    %v338 = vadd.f32 0.0, %v337
    %339 = vmatmul.bf16.gmra.mxu0 %v211
    %v340 = vpop.f32.mrf.mxu0
    %v341 = vadd.f32 0.0, %v340
    %v342 = vpop.f32.mrf.mxu0
    %v343 = vadd.f32 0.0, %v342
    %344 = vmatmul.bf16.gmra.mxu0 %v212
    %v345 = vpop.f32.mrf.mxu0
    %v346 = vadd.f32 0.0, %v345
    %v347 = vpop.f32.mrf.mxu0
    %v348 = vadd.f32 0.0, %v347
    %349 = vmatmul.bf16.gmra.mxu0 %v213
    %v350 = vpop.f32.mrf.mxu0
    %v351 = vadd.f32 0.0, %v350
    %v352 = vpop.f32.mrf.mxu0
    %v353 = vadd.f32 0.0, %v352
    %354 = vmatmul.bf16.gmra.mxu0 %v214
    %v355 = vpop.f32.mrf.mxu0
    %v356 = vadd.f32 0.0, %v355
    %v357 = vpop.f32.mrf.mxu0
    %v358 = vadd.f32 0.0, %v357
    %359 = vmatmul.bf16.gmra.mxu0 %v215
    %v360 = vpop.f32.mrf.mxu0
    %v361 = vadd.f32 0.0, %v360
    %v362 = vpop.f32.mrf.mxu0
    %v363 = vadd.f32 0.0, %v362
    %364 = vmatmul.bf16.gmra.mxu0 %v216
    %v365 = vpop.f32.mrf.mxu0
    %v366 = vadd.f32 0.0, %v365
    %v367 = vpop.f32.mrf.mxu0
    %v368 = vadd.f32 0.0, %v367
    %369 = vmatmul.bf16.gmra.mxu0 %v217
    %v370 = vpop.f32.mrf.mxu0
    %v371 = vadd.f32 0.0, %v370
    %v372 = vpop.f32.mrf.mxu0
    %v373 = vadd.f32 0.0, %v372
    %374 = vmatmul.bf16.gmra.mxu0 %v218
    %v375 = vpop.f32.mrf.mxu0
    %v376 = vadd.f32 0.0, %v375
    %v377 = vpop.f32.mrf.mxu0
    %v378 = vadd.f32 0.0, %v377
    %379 = vmatmul.bf16.gmra.mxu0 %v219
    %v380 = vpop.f32.mrf.mxu0
    %v381 = vadd.f32 0.0, %v380
    %v382 = vpop.f32.mrf.mxu0
    %v383 = vadd.f32 0.0, %v382
    %384 = vmatmul.bf16.gmra.mxu0 %v220
    %v385 = vpop.f32.mrf.mxu0
    %v386 = vadd.f32 0.0, %v385
    %v387 = vpop.f32.mrf.mxu0
    %v388 = vadd.f32 0.0, %v387
    %389 = vmatmul.bf16.gmra.mxu0 %v221
    %v390 = vpop.f32.mrf.mxu0
    %v391 = vadd.f32 0.0, %v390
    %v392 = vpop.f32.mrf.mxu0
    %v393 = vadd.f32 0.0, %v392
    %394 = vmatmul.bf16.gmra.mxu0 %v222
    %v395 = vpop.f32.mrf.mxu0
    %v396 = vadd.f32 0.0, %v395
    %v397 = vpop.f32.mrf.mxu0
    %v398 = vadd.f32 0.0, %v397
    %399 = vmatmul.bf16.gmra.mxu0 %v223
    %v400 = vpop.f32.mrf.mxu0
    %v401 = vadd.f32 0.0, %v400
    %v402 = vpop.f32.mrf.mxu0
    %v403 = vadd.f32 0.0, %v402
    %404 = vmatmul.bf16.gmra.mxu0 %v224
    %v405 = vpop.f32.mrf.mxu0
    %v406 = vadd.f32 0.0, %v405
    %v407 = vpop.f32.mrf.mxu0
    %v408 = vadd.f32 0.0, %v407
    %409 = vdwg.mxu0
    %410 = vmatpush.bf16.msra.mxu0 %v304
    %411 = vmatpush.bf16.msra.mxu0 %v302
    %412 = vmatpush.bf16.msra.mxu0 %v300
    %413 = vmatpush.bf16.msra.mxu0 %v298
    %414 = vmatpush.bf16.msra.mxu0 %v296
    %415 = vmatpush.bf16.msra.mxu0 %v294
    %416 = vmatpush.bf16.msra.mxu0 %v292
    %417 = vmatpush.bf16.msra.mxu0 %v290
    %418 = vmatmul.bf16.gmra.mxu0 %v209
    %v419 = vpop.f32.mrf.mxu0
    %v420 = vadd.f32 0.0, %v419
    %v421 = vpop.f32.mrf.mxu0
    %v422 = vadd.f32 0.0, %v421
    %423 = vmatmul.bf16.gmra.mxu0 %v210
    %v424 = vpop.f32.mrf.mxu0
    %v425 = vadd.f32 0.0, %v424
    %v426 = vpop.f32.mrf.mxu0
    %v427 = vadd.f32 0.0, %v426
    %428 = vmatmul.bf16.gmra.mxu0 %v211
    %v429 = vpop.f32.mrf.mxu0
    %v430 = vadd.f32 0.0, %v429
    %v431 = vpop.f32.mrf.mxu0
    %v432 = vadd.f32 0.0, %v431
    %433 = vmatmul.bf16.gmra.mxu0 %v212
    %v434 = vpop.f32.mrf.mxu0
    %v435 = vadd.f32 0.0, %v434
    %v436 = vpop.f32.mrf.mxu0
    %v437 = vadd.f32 0.0, %v436
    %438 = vmatmul.bf16.gmra.mxu0 %v213
    %v439 = vpop.f32.mrf.mxu0
    %v440 = vadd.f32 0.0, %v439
    %v441 = vpop.f32.mrf.mxu0
    %v442 = vadd.f32 0.0, %v441
    %443 = vmatmul.bf16.gmra.mxu0 %v214
    %v444 = vpop.f32.mrf.mxu0
    %v445 = vadd.f32 0.0, %v444
    %v446 = vpop.f32.mrf.mxu0
    %v447 = vadd.f32 0.0, %v446
    %448 = vmatmul.bf16.gmra.mxu0 %v215
    %v449 = vpop.f32.mrf.mxu0
    %v450 = vadd.f32 0.0, %v449
    %v451 = vpop.f32.mrf.mxu0
    %v452 = vadd.f32 0.0, %v451
    %453 = vmatmul.bf16.gmra.mxu0 %v216
    %v454 = vpop.f32.mrf.mxu0
    %v455 = vadd.f32 0.0, %v454
    %v456 = vpop.f32.mrf.mxu0
    %v457 = vadd.f32 0.0, %v456
    %458 = vmatmul.bf16.gmra.mxu0 %v217
    %v459 = vpop.f32.mrf.mxu0
    %v460 = vadd.f32 0.0, %v459
    %v461 = vpop.f32.mrf.mxu0
    %v462 = vadd.f32 0.0, %v461
    %463 = vmatmul.bf16.gmra.mxu0 %v218
    %v464 = vpop.f32.mrf.mxu0
    %v465 = vadd.f32 0.0, %v464
    %v466 = vpop.f32.mrf.mxu0
    %v467 = vadd.f32 0.0, %v466
    %468 = vmatmul.bf16.gmra.mxu0 %v219
    %v469 = vpop.f32.mrf.mxu0
    %v470 = vadd.f32 0.0, %v469
    %v471 = vpop.f32.mrf.mxu0
    %v472 = vadd.f32 0.0, %v471
    %473 = vmatmul.bf16.gmra.mxu0 %v220
    %v474 = vpop.f32.mrf.mxu0
    %v475 = vadd.f32 0.0, %v474
    %v476 = vpop.f32.mrf.mxu0
    %v477 = vadd.f32 0.0, %v476
    %478 = vmatmul.bf16.gmra.mxu0 %v221
    %v479 = vpop.f32.mrf.mxu0
    %v480 = vadd.f32 0.0, %v479
    %v481 = vpop.f32.mrf.mxu0
    %v482 = vadd.f32 0.0, %v481
    %483 = vmatmul.bf16.gmra.mxu0 %v222
    %v484 = vpop.f32.mrf.mxu0
    %v485 = vadd.f32 0.0, %v484
    %v486 = vpop.f32.mrf.mxu0
    %v487 = vadd.f32 0.0, %v486
    %488 = vmatmul.bf16.gmra.mxu0 %v223
    %v489 = vpop.f32.mrf.mxu0
    %v490 = vadd.f32 0.0, %v489
    %v491 = vpop.f32.mrf.mxu0
    %v492 = vadd.f32 0.0, %v491
    %493 = vmatmul.bf16.gmra.mxu0 %v224
    %v494 = vpop.f32.mrf.mxu0
    %v495 = vadd.f32 0.0, %v494
    %v496 = vpop.f32.mrf.mxu0
    %v497 = vadd.f32 0.0, %v496
    %498 = vdwg.mxu0
    %499 = vst [vmem:[#allocation2] sm:$0xff] %v420
    %500 = vst [vmem:[#allocation2 + $0x8] sm:$0xff] %v422
    %501 = vst [vmem:[#allocation2 + $0x10] sm:$0xff] %v425
    %502 = vst [vmem:[#allocation2 + $0x18] sm:$0xff] %v427
    %503 = vst [vmem:[#allocation2 + $0x20] sm:$0xff] %v430
    %504 = vst [vmem:[#allocation2 + $0x28] sm:$0xff] %v432
    %505 = vst [vmem:[#allocation2 + $0x30] sm:$0xff] %v435
    %506 = vst [vmem:[#allocation2 + $0x38] sm:$0xff] %v437
    %507 = vst [vmem:[#allocation2 + $0x40] sm:$0xff] %v440
    %508 = vst [vmem:[#allocation2 + $0x48] sm:$0xff] %v442
    %509 = vst [vmem:[#allocation2 + $0x50] sm:$0xff] %v445
    %510 = vst [vmem:[#allocation2 + $0x58] sm:$0xff] %v447
    %511 = vst [vmem:[#allocation2 + $0x60] sm:$0xff] %v450
    %512 = vst [vmem:[#allocation2 + $0x68] sm:$0xff] %v452
    %513 = vst [vmem:[#allocation2 + $0x70] sm:$0xff] %v455
    %514 = vst [vmem:[#allocation2 + $0x78] sm:$0xff] %v457
    %515 = vst [vmem:[#allocation2 + $0x80] sm:$0xff] %v460
    %516 = vst [vmem:[#allocation2 + $0x88] sm:$0xff] %v462
    %517 = vst [vmem:[#allocation2 + $0x90] sm:$0xff] %v465
    %518 = vst [vmem:[#allocation2 + $0x98] sm:$0xff] %v467
    %519 = vst [vmem:[#allocation2 + $0xa0] sm:$0xff] %v470
    %520 = vst [vmem:[#allocation2 + $0xa8] sm:$0xff] %v472
    %521 = vst [vmem:[#allocation2 + $0xb0] sm:$0xff] %v475
    %522 = vst [vmem:[#allocation2 + $0xb8] sm:$0xff] %v477
    %523 = vst [vmem:[#allocation2 + $0xc0] sm:$0xff] %v480
    %524 = vst [vmem:[#allocation2 + $0xc8] sm:$0xff] %v482
    %525 = vst [vmem:[#allocation2 + $0xd0] sm:$0xff] %v485
    %526 = vst [vmem:[#allocation2 + $0xd8] sm:$0xff] %v487
    %527 = vst [vmem:[#allocation2 + $0xe0] sm:$0xff] %v490
    %528 = vst [vmem:[#allocation2 + $0xe8] sm:$0xff] %v492
    %529 = vst [vmem:[#allocation2 + $0xf0] sm:$0xff] %v495
    %530 = vst [vmem:[#allocation2 + $0xf8] sm:$0xff] %v497
    %v531 = vld [vmem:[#allocation8] sm:$0x1]
    %v532 = vperm.slane %v531, 0
    %v533 = vadd.f32 %v331, %v532
    %v534 = vadd.f32 %v333, %v532
    %v535 = vadd.f32 %v336, %v532
    %v536 = vadd.f32 %v338, %v532
    %v537 = vadd.f32 %v341, %v532
    %v538 = vadd.f32 %v343, %v532
    %v539 = vadd.f32 %v346, %v532
    %v540 = vadd.f32 %v348, %v532
    %v541 = vadd.f32 %v351, %v532
    %v542 = vadd.f32 %v353, %v532
    %v543 = vadd.f32 %v356, %v532
    %v544 = vadd.f32 %v358, %v532
    %v545 = vadd.f32 %v361, %v532
    %v546 = vadd.f32 %v363, %v532
    %v547 = vadd.f32 %v366, %v532
    %v548 = vadd.f32 %v368, %v532
    %v549 = vadd.f32 %v371, %v532
    %v550 = vadd.f32 %v373, %v532
    %v551 = vadd.f32 %v376, %v532
    %v552 = vadd.f32 %v378, %v532
    %v553 = vadd.f32 %v381, %v532
    %v554 = vadd.f32 %v383, %v532
    %v555 = vadd.f32 %v386, %v532
    %v556 = vadd.f32 %v388, %v532
    %v557 = vadd.f32 %v391, %v532
    %v558 = vadd.f32 %v393, %v532
    %v559 = vadd.f32 %v396, %v532
    %v560 = vadd.f32 %v398, %v532
    %v561 = vadd.f32 %v401, %v532
    %v562 = vadd.f32 %v403, %v532
    %v563 = vadd.f32 %v406, %v532
    %v564 = vadd.f32 %v408, %v532
    %v565 = vxor.u32 %v533, 2147483648
    %v566 = vxor.u32 %v534, 2147483648
    %v567 = vxor.u32 %v535, 2147483648
    %v568 = vxor.u32 %v536, 2147483648
    %v569 = vxor.u32 %v537, 2147483648
    %v570 = vxor.u32 %v538, 2147483648
    %v571 = vxor.u32 %v539, 2147483648
    %v572 = vxor.u32 %v540, 2147483648
    %v573 = vxor.u32 %v541, 2147483648
    %v574 = vxor.u32 %v542, 2147483648
    %v575 = vxor.u32 %v543, 2147483648
    %v576 = vxor.u32 %v544, 2147483648
    %v577 = vxor.u32 %v545, 2147483648
    %v578 = vxor.u32 %v546, 2147483648
    %v579 = vxor.u32 %v547, 2147483648
    %v580 = vxor.u32 %v548, 2147483648
    %v581 = vxor.u32 %v549, 2147483648
    %v582 = vxor.u32 %v550, 2147483648
    %v583 = vxor.u32 %v551, 2147483648
    %v584 = vxor.u32 %v552, 2147483648
    %v585 = vxor.u32 %v553, 2147483648
    %v586 = vxor.u32 %v554, 2147483648
    %v587 = vxor.u32 %v555, 2147483648
    %v588 = vxor.u32 %v556, 2147483648
    %v589 = vxor.u32 %v557, 2147483648
    %v590 = vxor.u32 %v558, 2147483648
    %v591 = vxor.u32 %v559, 2147483648
    %v592 = vxor.u32 %v560, 2147483648
    %v593 = vxor.u32 %v561, 2147483648
    %v594 = vxor.u32 %v562, 2147483648
    %v595 = vxor.u32 %v563, 2147483648
    %v596 = vxor.u32 %v564, 2147483648
    %v597 = vmul.f32 %v565, 1.442695
    %v598 = vpow.pop %v597
    %v599 = vmul.f32 %v566, 1.442695
    %v600 = vpow.pop %v599
    %v601 = vmul.f32 %v567, 1.442695
    %v602 = vpow.pop %v601
    %v603 = vmul.f32 %v568, 1.442695
    %v604 = vpow.pop %v603
    %v605 = vmul.f32 %v569, 1.442695
    %v606 = vpow.pop %v605
    %v607 = vmul.f32 %v570, 1.442695
    %v608 = vpow.pop %v607
    %v609 = vmul.f32 %v571, 1.442695
    %v610 = vpow.pop %v609
    %v611 = vmul.f32 %v572, 1.442695
    %v612 = vpow.pop %v611
    %v613 = vmul.f32 %v573, 1.442695
    %v614 = vpow.pop %v613
    %v615 = vmul.f32 %v574, 1.442695
    %v616 = vpow.pop %v615
    %v617 = vmul.f32 %v575, 1.442695
    %v618 = vpow.pop %v617
    %v619 = vmul.f32 %v576, 1.442695
    %v620 = vpow.pop %v619
    %v621 = vmul.f32 %v577, 1.442695
    %v622 = vpow.pop %v621
    %v623 = vmul.f32 %v578, 1.442695
    %v624 = vpow.pop %v623
    %v625 = vmul.f32 %v579, 1.442695
    %v626 = vpow.pop %v625
    %v627 = vmul.f32 %v580, 1.442695
    %v628 = vpow.pop %v627
    %v629 = vmul.f32 %v581, 1.442695
    %v630 = vpow.pop %v629
    %v631 = vmul.f32 %v582, 1.442695
    %v632 = vpow.pop %v631
    %v633 = vmul.f32 %v583, 1.442695
    %v634 = vpow.pop %v633
    %v635 = vmul.f32 %v584, 1.442695
    %v636 = vpow.pop %v635
    %v637 = vmul.f32 %v585, 1.442695
    %v638 = vpow.pop %v637
    %v639 = vmul.f32 %v586, 1.442695
    %v640 = vpow.pop %v639
    %v641 = vmul.f32 %v587, 1.442695
    %v642 = vpow.pop %v641
    %v643 = vmul.f32 %v588, 1.442695
    %v644 = vpow.pop %v643
    %v645 = vmul.f32 %v589, 1.442695
    %v646 = vpow.pop %v645
    %v647 = vmul.f32 %v590, 1.442695
    %v648 = vpow.pop %v647
    %v649 = vmul.f32 %v591, 1.442695
    %v650 = vpow.pop %v649
    %v651 = vmul.f32 %v592, 1.442695
    %v652 = vpow.pop %v651
    %v653 = vmul.f32 %v593, 1.442695
    %v654 = vpow.pop %v653
    %v655 = vmul.f32 %v594, 1.442695
    %v656 = vpow.pop %v655
    %v657 = vmul.f32 %v595, 1.442695
    %v658 = vpow.pop %v657
    %v659 = vmul.f32 %v596, 1.442695
    %v660 = vpow.pop %v659
    %v661 = vadd.f32 %v598, 1.0
    %v662 = vadd.f32 %v600, 1.0
    %v663 = vadd.f32 %v602, 1.0
    %v664 = vadd.f32 %v604, 1.0
    %v665 = vadd.f32 %v606, 1.0
    %v666 = vadd.f32 %v608, 1.0
    %v667 = vadd.f32 %v610, 1.0
    %v668 = vadd.f32 %v612, 1.0
    %v669 = vadd.f32 %v614, 1.0
    %v670 = vadd.f32 %v616, 1.0
    %v671 = vadd.f32 %v618, 1.0
    %v672 = vadd.f32 %v620, 1.0
    %v673 = vadd.f32 %v622, 1.0
    %v674 = vadd.f32 %v624, 1.0
    %v675 = vadd.f32 %v626, 1.0
    %v676 = vadd.f32 %v628, 1.0
    %v677 = vadd.f32 %v630, 1.0
    %v678 = vadd.f32 %v632, 1.0
    %v679 = vadd.f32 %v634, 1.0
    %v680 = vadd.f32 %v636, 1.0
    %v681 = vadd.f32 %v638, 1.0
    %v682 = vadd.f32 %v640, 1.0
    %v683 = vadd.f32 %v642, 1.0
    %v684 = vadd.f32 %v644, 1.0
    %v685 = vadd.f32 %v646, 1.0
    %v686 = vadd.f32 %v648, 1.0
    %v687 = vadd.f32 %v650, 1.0
    %v688 = vadd.f32 %v652, 1.0
    %v689 = vadd.f32 %v654, 1.0
    %v690 = vadd.f32 %v656, 1.0
    %v691 = vadd.f32 %v658, 1.0
    %v692 = vadd.f32 %v660, 1.0
    %v693 = vrcp.pop %v661
    %v694 = vmul.f32 %v661, %v693
    %v695 = vsub.f32 1.0, %v694
    %v696 = vmul.f32 %v693, %v695
    %v697 = vadd.f32 %v693, %v696
    %vm698 = vweird.f32 %v661
    %vm699 = vweird.f32 %v693
    %vm700 = vmor %vm698, %vm699
    %v701 = vsel %vm700, %v693, %v697
    %v702 = vand.u32 2147483647, %v661
    %vm703 = vcmp.eq.f32.partialorder %v702, 8.507059e+37
    %v704 = vand.u32 %v661, 2147483648
    %v705 = vor.u32 1.1754944e-38, %v704
    %v706 = vsel %vm703, %v705, %v701
    %v707 = vmul.f32 1.0, %v706
    %v708 = vrcp.pop %v662
    %v709 = vmul.f32 %v662, %v708
    %v710 = vsub.f32 1.0, %v709
    %v711 = vmul.f32 %v708, %v710
    %v712 = vadd.f32 %v708, %v711
    %vm713 = vweird.f32 %v662
    %vm714 = vweird.f32 %v708
    %vm715 = vmor %vm713, %vm714
    %v716 = vsel %vm715, %v708, %v712
    %v717 = vand.u32 2147483647, %v662
    %vm718 = vcmp.eq.f32.partialorder %v717, 8.507059e+37
    %v719 = vand.u32 %v662, 2147483648
    %v720 = vor.u32 1.1754944e-38, %v719
    %v721 = vsel %vm718, %v720, %v716
    %v722 = vmul.f32 1.0, %v721
    %v723 = vrcp.pop %v663
    %v724 = vmul.f32 %v663, %v723
    %v725 = vsub.f32 1.0, %v724
    %v726 = vmul.f32 %v723, %v725
    %v727 = vadd.f32 %v723, %v726
    %vm728 = vweird.f32 %v663
    %vm729 = vweird.f32 %v723
    %vm730 = vmor %vm728, %vm729
    %v731 = vsel %vm730, %v723, %v727
    %v732 = vand.u32 2147483647, %v663
    %vm733 = vcmp.eq.f32.partialorder %v732, 8.507059e+37
    %v734 = vand.u32 %v663, 2147483648
    %v735 = vor.u32 1.1754944e-38, %v734
    %v736 = vsel %vm733, %v735, %v731
    %v737 = vmul.f32 1.0, %v736
    %v738 = vrcp.pop %v664
    %v739 = vmul.f32 %v664, %v738
    %v740 = vsub.f32 1.0, %v739
    %v741 = vmul.f32 %v738, %v740
    %v742 = vadd.f32 %v738, %v741
    %vm743 = vweird.f32 %v664
    %vm744 = vweird.f32 %v738
    %vm745 = vmor %vm743, %vm744
    %v746 = vsel %vm745, %v738, %v742
    %v747 = vand.u32 2147483647, %v664
    %vm748 = vcmp.eq.f32.partialorder %v747, 8.507059e+37
    %v749 = vand.u32 %v664, 2147483648
    %v750 = vor.u32 1.1754944e-38, %v749
    %v751 = vsel %vm748, %v750, %v746
    %v752 = vmul.f32 1.0, %v751
    %v753 = vrcp.pop %v665
    %v754 = vmul.f32 %v665, %v753
    %v755 = vsub.f32 1.0, %v754
    %v756 = vmul.f32 %v753, %v755
    %v757 = vadd.f32 %v753, %v756
    %vm758 = vweird.f32 %v665
    %vm759 = vweird.f32 %v753
    %vm760 = vmor %vm758, %vm759
    %v761 = vsel %vm760, %v753, %v757
    %v762 = vand.u32 2147483647, %v665
    %vm763 = vcmp.eq.f32.partialorder %v762, 8.507059e+37
    %v764 = vand.u32 %v665, 2147483648
    %v765 = vor.u32 1.1754944e-38, %v764
    %v766 = vsel %vm763, %v765, %v761
    %v767 = vmul.f32 1.0, %v766
    %v768 = vrcp.pop %v666
    %v769 = vmul.f32 %v666, %v768
    %v770 = vsub.f32 1.0, %v769
    %v771 = vmul.f32 %v768, %v770
    %v772 = vadd.f32 %v768, %v771
    %vm773 = vweird.f32 %v666
    %vm774 = vweird.f32 %v768
    %vm775 = vmor %vm773, %vm774
    %v776 = vsel %vm775, %v768, %v772
    %v777 = vand.u32 2147483647, %v666
    %vm778 = vcmp.eq.f32.partialorder %v777, 8.507059e+37
    %v779 = vand.u32 %v666, 2147483648
    %v780 = vor.u32 1.1754944e-38, %v779
    %v781 = vsel %vm778, %v780, %v776
    %v782 = vmul.f32 1.0, %v781
    %v783 = vrcp.pop %v667
    %v784 = vmul.f32 %v667, %v783
    %v785 = vsub.f32 1.0, %v784
    %v786 = vmul.f32 %v783, %v785
    %v787 = vadd.f32 %v783, %v786
    %vm788 = vweird.f32 %v667
    %vm789 = vweird.f32 %v783
    %vm790 = vmor %vm788, %vm789
    %v791 = vsel %vm790, %v783, %v787
    %v792 = vand.u32 2147483647, %v667
    %vm793 = vcmp.eq.f32.partialorder %v792, 8.507059e+37
    %v794 = vand.u32 %v667, 2147483648
    %v795 = vor.u32 1.1754944e-38, %v794
    %v796 = vsel %vm793, %v795, %v791
    %v797 = vmul.f32 1.0, %v796
    %v798 = vrcp.pop %v668
    %v799 = vmul.f32 %v668, %v798
    %v800 = vsub.f32 1.0, %v799
    %v801 = vmul.f32 %v798, %v800
    %v802 = vadd.f32 %v798, %v801
    %vm803 = vweird.f32 %v668
    %vm804 = vweird.f32 %v798
    %vm805 = vmor %vm803, %vm804
    %v806 = vsel %vm805, %v798, %v802
    %v807 = vand.u32 2147483647, %v668
    %vm808 = vcmp.eq.f32.partialorder %v807, 8.507059e+37
    %v809 = vand.u32 %v668, 2147483648
    %v810 = vor.u32 1.1754944e-38, %v809
    %v811 = vsel %vm808, %v810, %v806
    %v812 = vmul.f32 1.0, %v811
    %v813 = vrcp.pop %v669
    %v814 = vmul.f32 %v669, %v813
    %v815 = vsub.f32 1.0, %v814
    %v816 = vmul.f32 %v813, %v815
    %v817 = vadd.f32 %v813, %v816
    %vm818 = vweird.f32 %v669
    %vm819 = vweird.f32 %v813
    %vm820 = vmor %vm818, %vm819
    %v821 = vsel %vm820, %v813, %v817
    %v822 = vand.u32 2147483647, %v669
    %vm823 = vcmp.eq.f32.partialorder %v822, 8.507059e+37
    %v824 = vand.u32 %v669, 2147483648
    %v825 = vor.u32 1.1754944e-38, %v824
    %v826 = vsel %vm823, %v825, %v821
    %v827 = vmul.f32 1.0, %v826
    %v828 = vrcp.pop %v670
    %v829 = vmul.f32 %v670, %v828
    %v830 = vsub.f32 1.0, %v829
    %v831 = vmul.f32 %v828, %v830
    %v832 = vadd.f32 %v828, %v831
    %vm833 = vweird.f32 %v670
    %vm834 = vweird.f32 %v828
    %vm835 = vmor %vm833, %vm834
    %v836 = vsel %vm835, %v828, %v832
    %v837 = vand.u32 2147483647, %v670
    %vm838 = vcmp.eq.f32.partialorder %v837, 8.507059e+37
    %v839 = vand.u32 %v670, 2147483648
    %v840 = vor.u32 1.1754944e-38, %v839
    %v841 = vsel %vm838, %v840, %v836
    %v842 = vmul.f32 1.0, %v841
    %v843 = vrcp.pop %v671
    %v844 = vmul.f32 %v671, %v843
    %v845 = vsub.f32 1.0, %v844
    %v846 = vmul.f32 %v843, %v845
    %v847 = vadd.f32 %v843, %v846
    %vm848 = vweird.f32 %v671
    %vm849 = vweird.f32 %v843
    %vm850 = vmor %vm848, %vm849
    %v851 = vsel %vm850, %v843, %v847
    %v852 = vand.u32 2147483647, %v671
    %vm853 = vcmp.eq.f32.partialorder %v852, 8.507059e+37
    %v854 = vand.u32 %v671, 2147483648
    %v855 = vor.u32 1.1754944e-38, %v854
    %v856 = vsel %vm853, %v855, %v851
    %v857 = vmul.f32 1.0, %v856
    %v858 = vrcp.pop %v672
    %v859 = vmul.f32 %v672, %v858
    %v860 = vsub.f32 1.0, %v859
    %v861 = vmul.f32 %v858, %v860
    %v862 = vadd.f32 %v858, %v861
    %vm863 = vweird.f32 %v672
    %vm864 = vweird.f32 %v858
    %vm865 = vmor %vm863, %vm864
    %v866 = vsel %vm865, %v858, %v862
    %v867 = vand.u32 2147483647, %v672
    %vm868 = vcmp.eq.f32.partialorder %v867, 8.507059e+37
    %v869 = vand.u32 %v672, 2147483648
    %v870 = vor.u32 1.1754944e-38, %v869
    %v871 = vsel %vm868, %v870, %v866
    %v872 = vmul.f32 1.0, %v871
    %v873 = vrcp.pop %v673
    %v874 = vmul.f32 %v673, %v873
    %v875 = vsub.f32 1.0, %v874
    %v876 = vmul.f32 %v873, %v875
    %v877 = vadd.f32 %v873, %v876
    %vm878 = vweird.f32 %v673
    %vm879 = vweird.f32 %v873
    %vm880 = vmor %vm878, %vm879
    %v881 = vsel %vm880, %v873, %v877
    %v882 = vand.u32 2147483647, %v673
    %vm883 = vcmp.eq.f32.partialorder %v882, 8.507059e+37
    %v884 = vand.u32 %v673, 2147483648
    %v885 = vor.u32 1.1754944e-38, %v884
    %v886 = vsel %vm883, %v885, %v881
    %v887 = vmul.f32 1.0, %v886
    %v888 = vrcp.pop %v674
    %v889 = vmul.f32 %v674, %v888
    %v890 = vsub.f32 1.0, %v889
    %v891 = vmul.f32 %v888, %v890
    %v892 = vadd.f32 %v888, %v891
    %vm893 = vweird.f32 %v674
    %vm894 = vweird.f32 %v888
    %vm895 = vmor %vm893, %vm894
    %v896 = vsel %vm895, %v888, %v892
    %v897 = vand.u32 2147483647, %v674
    %vm898 = vcmp.eq.f32.partialorder %v897, 8.507059e+37
    %v899 = vand.u32 %v674, 2147483648
    %v900 = vor.u32 1.1754944e-38, %v899
    %v901 = vsel %vm898, %v900, %v896
    %v902 = vmul.f32 1.0, %v901
    %v903 = vrcp.pop %v675
    %v904 = vmul.f32 %v675, %v903
    %v905 = vsub.f32 1.0, %v904
    %v906 = vmul.f32 %v903, %v905
    %v907 = vadd.f32 %v903, %v906
    %vm908 = vweird.f32 %v675
    %vm909 = vweird.f32 %v903
    %vm910 = vmor %vm908, %vm909
    %v911 = vsel %vm910, %v903, %v907
    %v912 = vand.u32 2147483647, %v675
    %vm913 = vcmp.eq.f32.partialorder %v912, 8.507059e+37
    %v914 = vand.u32 %v675, 2147483648
    %v915 = vor.u32 1.1754944e-38, %v914
    %v916 = vsel %vm913, %v915, %v911
    %v917 = vmul.f32 1.0, %v916
    %v918 = vrcp.pop %v676
    %v919 = vmul.f32 %v676, %v918
    %v920 = vsub.f32 1.0, %v919
    %v921 = vmul.f32 %v918, %v920
    %v922 = vadd.f32 %v918, %v921
    %vm923 = vweird.f32 %v676
    %vm924 = vweird.f32 %v918
    %vm925 = vmor %vm923, %vm924
    %v926 = vsel %vm925, %v918, %v922
    %v927 = vand.u32 2147483647, %v676
    %vm928 = vcmp.eq.f32.partialorder %v927, 8.507059e+37
    %v929 = vand.u32 %v676, 2147483648
    %v930 = vor.u32 1.1754944e-38, %v929
    %v931 = vsel %vm928, %v930, %v926
    %v932 = vmul.f32 1.0, %v931
    %v933 = vrcp.pop %v677
    %v934 = vmul.f32 %v677, %v933
    %v935 = vsub.f32 1.0, %v934
    %v936 = vmul.f32 %v933, %v935
    %v937 = vadd.f32 %v933, %v936
    %vm938 = vweird.f32 %v677
    %vm939 = vweird.f32 %v933
    %vm940 = vmor %vm938, %vm939
    %v941 = vsel %vm940, %v933, %v937
    %v942 = vand.u32 2147483647, %v677
    %vm943 = vcmp.eq.f32.partialorder %v942, 8.507059e+37
    %v944 = vand.u32 %v677, 2147483648
    %v945 = vor.u32 1.1754944e-38, %v944
    %v946 = vsel %vm943, %v945, %v941
    %v947 = vmul.f32 1.0, %v946
    %v948 = vrcp.pop %v678
    %v949 = vmul.f32 %v678, %v948
    %v950 = vsub.f32 1.0, %v949
    %v951 = vmul.f32 %v948, %v950
    %v952 = vadd.f32 %v948, %v951
    %vm953 = vweird.f32 %v678
    %vm954 = vweird.f32 %v948
    %vm955 = vmor %vm953, %vm954
    %v956 = vsel %vm955, %v948, %v952
    %v957 = vand.u32 2147483647, %v678
    %vm958 = vcmp.eq.f32.partialorder %v957, 8.507059e+37
    %v959 = vand.u32 %v678, 2147483648
    %v960 = vor.u32 1.1754944e-38, %v959
    %v961 = vsel %vm958, %v960, %v956
    %v962 = vmul.f32 1.0, %v961
    %v963 = vrcp.pop %v679
    %v964 = vmul.f32 %v679, %v963
    %v965 = vsub.f32 1.0, %v964
    %v966 = vmul.f32 %v963, %v965
    %v967 = vadd.f32 %v963, %v966
    %vm968 = vweird.f32 %v679
    %vm969 = vweird.f32 %v963
    %vm970 = vmor %vm968, %vm969
    %v971 = vsel %vm970, %v963, %v967
    %v972 = vand.u32 2147483647, %v679
    %vm973 = vcmp.eq.f32.partialorder %v972, 8.507059e+37
    %v974 = vand.u32 %v679, 2147483648
    %v975 = vor.u32 1.1754944e-38, %v974
    %v976 = vsel %vm973, %v975, %v971
    %v977 = vmul.f32 1.0, %v976
    %v978 = vrcp.pop %v680
    %v979 = vmul.f32 %v680, %v978
    %v980 = vsub.f32 1.0, %v979
    %v981 = vmul.f32 %v978, %v980
    %v982 = vadd.f32 %v978, %v981
    %vm983 = vweird.f32 %v680
    %vm984 = vweird.f32 %v978
    %vm985 = vmor %vm983, %vm984
    %v986 = vsel %vm985, %v978, %v982
    %v987 = vand.u32 2147483647, %v680
    %vm988 = vcmp.eq.f32.partialorder %v987, 8.507059e+37
    %v989 = vand.u32 %v680, 2147483648
    %v990 = vor.u32 1.1754944e-38, %v989
    %v991 = vsel %vm988, %v990, %v986
    %v992 = vmul.f32 1.0, %v991
    %v993 = vrcp.pop %v681
    %v994 = vmul.f32 %v681, %v993
    %v995 = vsub.f32 1.0, %v994
    %v996 = vmul.f32 %v993, %v995
    %v997 = vadd.f32 %v993, %v996
    %vm998 = vweird.f32 %v681
    %vm999 = vweird.f32 %v993
    %vm1000 = vmor %vm998, %vm999
    %v1001 = vsel %vm1000, %v993, %v997
    %v1002 = vand.u32 2147483647, %v681
    %vm1003 = vcmp.eq.f32.partialorder %v1002, 8.507059e+37
    %v1004 = vand.u32 %v681, 2147483648
    %v1005 = vor.u32 1.1754944e-38, %v1004
    %v1006 = vsel %vm1003, %v1005, %v1001
    %v1007 = vmul.f32 1.0, %v1006
    %v1008 = vrcp.pop %v682
    %v1009 = vmul.f32 %v682, %v1008
    %v1010 = vsub.f32 1.0, %v1009
    %v1011 = vmul.f32 %v1008, %v1010
    %v1012 = vadd.f32 %v1008, %v1011
    %vm1013 = vweird.f32 %v682
    %vm1014 = vweird.f32 %v1008
    %vm1015 = vmor %vm1013, %vm1014
    %v1016 = vsel %vm1015, %v1008, %v1012
    %v1017 = vand.u32 2147483647, %v682
    %vm1018 = vcmp.eq.f32.partialorder %v1017, 8.507059e+37
    %v1019 = vand.u32 %v682, 2147483648
    %v1020 = vor.u32 1.1754944e-38, %v1019
    %v1021 = vsel %vm1018, %v1020, %v1016
    %v1022 = vmul.f32 1.0, %v1021
    %v1023 = vrcp.pop %v683
    %v1024 = vmul.f32 %v683, %v1023
    %v1025 = vsub.f32 1.0, %v1024
    %v1026 = vmul.f32 %v1023, %v1025
    %v1027 = vadd.f32 %v1023, %v1026
    %vm1028 = vweird.f32 %v683
    %vm1029 = vweird.f32 %v1023
    %vm1030 = vmor %vm1028, %vm1029
    %v1031 = vsel %vm1030, %v1023, %v1027
    %v1032 = vand.u32 2147483647, %v683
    %vm1033 = vcmp.eq.f32.partialorder %v1032, 8.507059e+37
    %v1034 = vand.u32 %v683, 2147483648
    %v1035 = vor.u32 1.1754944e-38, %v1034
    %v1036 = vsel %vm1033, %v1035, %v1031
    %v1037 = vmul.f32 1.0, %v1036
    %v1038 = vrcp.pop %v684
    %v1039 = vmul.f32 %v684, %v1038
    %v1040 = vsub.f32 1.0, %v1039
    %v1041 = vmul.f32 %v1038, %v1040
    %v1042 = vadd.f32 %v1038, %v1041
    %vm1043 = vweird.f32 %v684
    %vm1044 = vweird.f32 %v1038
    %vm1045 = vmor %vm1043, %vm1044
    %v1046 = vsel %vm1045, %v1038, %v1042
    %v1047 = vand.u32 2147483647, %v684
    %vm1048 = vcmp.eq.f32.partialorder %v1047, 8.507059e+37
    %v1049 = vand.u32 %v684, 2147483648
    %v1050 = vor.u32 1.1754944e-38, %v1049
    %v1051 = vsel %vm1048, %v1050, %v1046
    %v1052 = vmul.f32 1.0, %v1051
    %v1053 = vrcp.pop %v685
    %v1054 = vmul.f32 %v685, %v1053
    %v1055 = vsub.f32 1.0, %v1054
    %v1056 = vmul.f32 %v1053, %v1055
    %v1057 = vadd.f32 %v1053, %v1056
    %vm1058 = vweird.f32 %v685
    %vm1059 = vweird.f32 %v1053
    %vm1060 = vmor %vm1058, %vm1059
    %v1061 = vsel %vm1060, %v1053, %v1057
    %v1062 = vand.u32 2147483647, %v685
    %vm1063 = vcmp.eq.f32.partialorder %v1062, 8.507059e+37
    %v1064 = vand.u32 %v685, 2147483648
    %v1065 = vor.u32 1.1754944e-38, %v1064
    %v1066 = vsel %vm1063, %v1065, %v1061
    %v1067 = vmul.f32 1.0, %v1066
    %v1068 = vrcp.pop %v686
    %v1069 = vmul.f32 %v686, %v1068
    %v1070 = vsub.f32 1.0, %v1069
    %v1071 = vmul.f32 %v1068, %v1070
    %v1072 = vadd.f32 %v1068, %v1071
    %vm1073 = vweird.f32 %v686
    %vm1074 = vweird.f32 %v1068
    %vm1075 = vmor %vm1073, %vm1074
    %v1076 = vsel %vm1075, %v1068, %v1072
    %v1077 = vand.u32 2147483647, %v686
    %vm1078 = vcmp.eq.f32.partialorder %v1077, 8.507059e+37
    %v1079 = vand.u32 %v686, 2147483648
    %v1080 = vor.u32 1.1754944e-38, %v1079
    %v1081 = vsel %vm1078, %v1080, %v1076
    %v1082 = vmul.f32 1.0, %v1081
    %v1083 = vrcp.pop %v687
    %v1084 = vmul.f32 %v687, %v1083
    %v1085 = vsub.f32 1.0, %v1084
    %v1086 = vmul.f32 %v1083, %v1085
    %v1087 = vadd.f32 %v1083, %v1086
    %vm1088 = vweird.f32 %v687
    %vm1089 = vweird.f32 %v1083
    %vm1090 = vmor %vm1088, %vm1089
    %v1091 = vsel %vm1090, %v1083, %v1087
    %v1092 = vand.u32 2147483647, %v687
    %vm1093 = vcmp.eq.f32.partialorder %v1092, 8.507059e+37
    %v1094 = vand.u32 %v687, 2147483648
    %v1095 = vor.u32 1.1754944e-38, %v1094
    %v1096 = vsel %vm1093, %v1095, %v1091
    %v1097 = vmul.f32 1.0, %v1096
    %v1098 = vrcp.pop %v688
    %v1099 = vmul.f32 %v688, %v1098
    %v1100 = vsub.f32 1.0, %v1099
    %v1101 = vmul.f32 %v1098, %v1100
    %v1102 = vadd.f32 %v1098, %v1101
    %vm1103 = vweird.f32 %v688
    %vm1104 = vweird.f32 %v1098
    %vm1105 = vmor %vm1103, %vm1104
    %v1106 = vsel %vm1105, %v1098, %v1102
    %v1107 = vand.u32 2147483647, %v688
    %vm1108 = vcmp.eq.f32.partialorder %v1107, 8.507059e+37
    %v1109 = vand.u32 %v688, 2147483648
    %v1110 = vor.u32 1.1754944e-38, %v1109
    %v1111 = vsel %vm1108, %v1110, %v1106
    %v1112 = vmul.f32 1.0, %v1111
    %v1113 = vrcp.pop %v689
    %v1114 = vmul.f32 %v689, %v1113
    %v1115 = vsub.f32 1.0, %v1114
    %v1116 = vmul.f32 %v1113, %v1115
    %v1117 = vadd.f32 %v1113, %v1116
    %vm1118 = vweird.f32 %v689
    %vm1119 = vweird.f32 %v1113
    %vm1120 = vmor %vm1118, %vm1119
    %v1121 = vsel %vm1120, %v1113, %v1117
    %v1122 = vand.u32 2147483647, %v689
    %vm1123 = vcmp.eq.f32.partialorder %v1122, 8.507059e+37
    %v1124 = vand.u32 %v689, 2147483648
    %v1125 = vor.u32 1.1754944e-38, %v1124
    %v1126 = vsel %vm1123, %v1125, %v1121
    %v1127 = vmul.f32 1.0, %v1126
    %v1128 = vrcp.pop %v690
    %v1129 = vmul.f32 %v690, %v1128
    %v1130 = vsub.f32 1.0, %v1129
    %v1131 = vmul.f32 %v1128, %v1130
    %v1132 = vadd.f32 %v1128, %v1131
    %vm1133 = vweird.f32 %v690
    %vm1134 = vweird.f32 %v1128
    %vm1135 = vmor %vm1133, %vm1134
    %v1136 = vsel %vm1135, %v1128, %v1132
    %v1137 = vand.u32 2147483647, %v690
    %vm1138 = vcmp.eq.f32.partialorder %v1137, 8.507059e+37
    %v1139 = vand.u32 %v690, 2147483648
    %v1140 = vor.u32 1.1754944e-38, %v1139
    %v1141 = vsel %vm1138, %v1140, %v1136
    %v1142 = vmul.f32 1.0, %v1141
    %v1143 = vrcp.pop %v691
    %v1144 = vmul.f32 %v691, %v1143
    %v1145 = vsub.f32 1.0, %v1144
    %v1146 = vmul.f32 %v1143, %v1145
    %v1147 = vadd.f32 %v1143, %v1146
    %vm1148 = vweird.f32 %v691
    %vm1149 = vweird.f32 %v1143
    %vm1150 = vmor %vm1148, %vm1149
    %v1151 = vsel %vm1150, %v1143, %v1147
    %v1152 = vand.u32 2147483647, %v691
    %vm1153 = vcmp.eq.f32.partialorder %v1152, 8.507059e+37
    %v1154 = vand.u32 %v691, 2147483648
    %v1155 = vor.u32 1.1754944e-38, %v1154
    %v1156 = vsel %vm1153, %v1155, %v1151
    %v1157 = vmul.f32 1.0, %v1156
    %v1158 = vrcp.pop %v692
    %v1159 = vmul.f32 %v692, %v1158
    %v1160 = vsub.f32 1.0, %v1159
    %v1161 = vmul.f32 %v1158, %v1160
    %v1162 = vadd.f32 %v1158, %v1161
    %vm1163 = vweird.f32 %v692
    %vm1164 = vweird.f32 %v1158
    %vm1165 = vmor %vm1163, %vm1164
    %v1166 = vsel %vm1165, %v1158, %v1162
    %v1167 = vand.u32 2147483647, %v692
    %vm1168 = vcmp.eq.f32.partialorder %v1167, 8.507059e+37
    %v1169 = vand.u32 %v692, 2147483648
    %v1170 = vor.u32 1.1754944e-38, %v1169
    %v1171 = vsel %vm1168, %v1170, %v1166
    %v1172 = vmul.f32 1.0, %v1171
    %v1173 = vmul.f32 %v533, %v707
    %v1174 = vmul.f32 %v534, %v722
    %v1175 = vmul.f32 %v535, %v737
    %v1176 = vmul.f32 %v536, %v752
    %v1177 = vmul.f32 %v537, %v767
    %v1178 = vmul.f32 %v538, %v782
    %v1179 = vmul.f32 %v539, %v797
    %v1180 = vmul.f32 %v540, %v812
    %v1181 = vmul.f32 %v541, %v827
    %v1182 = vmul.f32 %v542, %v842
    %v1183 = vmul.f32 %v543, %v857
    %v1184 = vmul.f32 %v544, %v872
    %v1185 = vmul.f32 %v545, %v887
    %v1186 = vmul.f32 %v546, %v902
    %v1187 = vmul.f32 %v547, %v917
    %v1188 = vmul.f32 %v548, %v932
    %v1189 = vmul.f32 %v549, %v947
    %v1190 = vmul.f32 %v550, %v962
    %v1191 = vmul.f32 %v551, %v977
    %v1192 = vmul.f32 %v552, %v992
    %v1193 = vmul.f32 %v553, %v1007
    %v1194 = vmul.f32 %v554, %v1022
    %v1195 = vmul.f32 %v555, %v1037
    %v1196 = vmul.f32 %v556, %v1052
    %v1197 = vmul.f32 %v557, %v1067
    %v1198 = vmul.f32 %v558, %v1082
    %v1199 = vmul.f32 %v559, %v1097
    %v1200 = vmul.f32 %v560, %v1112
    %v1201 = vmul.f32 %v561, %v1127
    %v1202 = vmul.f32 %v562, %v1142
    %v1203 = vmul.f32 %v563, %v1157
    %v1204 = vmul.f32 %v564, %v1172
    %v1205 = vmul.f32 %v1173, 0.909
    %v1206 = vmul.f32 %v1174, 0.909
    %v1207 = vmul.f32 %v1175, 0.909
    %v1208 = vmul.f32 %v1176, 0.909
    %v1209 = vmul.f32 %v1177, 0.909
    %v1210 = vmul.f32 %v1178, 0.909
    %v1211 = vmul.f32 %v1179, 0.909
    %v1212 = vmul.f32 %v1180, 0.909
    %v1213 = vmul.f32 %v1181, 0.909
    %v1214 = vmul.f32 %v1182, 0.909
    %v1215 = vmul.f32 %v1183, 0.909
    %v1216 = vmul.f32 %v1184, 0.909
    %v1217 = vmul.f32 %v1185, 0.909
    %v1218 = vmul.f32 %v1186, 0.909
    %v1219 = vmul.f32 %v1187, 0.909
    %v1220 = vmul.f32 %v1188, 0.909
    %v1221 = vmul.f32 %v1189, 0.909
    %v1222 = vmul.f32 %v1190, 0.909
    %v1223 = vmul.f32 %v1191, 0.909
    %v1224 = vmul.f32 %v1192, 0.909
    %v1225 = vmul.f32 %v1193, 0.909
    %v1226 = vmul.f32 %v1194, 0.909
    %v1227 = vmul.f32 %v1195, 0.909
    %v1228 = vmul.f32 %v1196, 0.909
    %v1229 = vmul.f32 %v1197, 0.909
    %v1230 = vmul.f32 %v1198, 0.909
    %v1231 = vmul.f32 %v1199, 0.909
    %v1232 = vmul.f32 %v1200, 0.909
    %v1233 = vmul.f32 %v1201, 0.909
    %v1234 = vmul.f32 %v1202, 0.909
    %v1235 = vmul.f32 %v1203, 0.909
    %v1236 = vmul.f32 %v1204, 0.909
    %v1237 = vld [vmem:[#allocation9] sm:$0xf]
    %v1238 = vld [vmem:[#allocation9 + $0x4] sm:$0xf]
    %v1239 = vld [vmem:[#allocation9 + $0x8] sm:$0xf]
    %v1240 = vld [vmem:[#allocation9 + $0xc] sm:$0xf]
    %v1241 = vld [vmem:[#allocation9 + $0x10] sm:$0xf]
    %v1242 = vld [vmem:[#allocation9 + $0x14] sm:$0xf]
    %v1243 = vld [vmem:[#allocation9 + $0x18] sm:$0xf]
    %v1244 = vld [vmem:[#allocation9 + $0x1c] sm:$0xf]
    %v1245 = vld [vmem:[#allocation9 + $0x20] sm:$0xf]
    %v1246 = vld [vmem:[#allocation9 + $0x24] sm:$0xf]
    %v1247 = vld [vmem:[#allocation9 + $0x28] sm:$0xf]
    %v1248 = vld [vmem:[#allocation9 + $0x2c] sm:$0xf]
    %v1249 = vld [vmem:[#allocation9 + $0x30] sm:$0xf]
    %v1250 = vld [vmem:[#allocation9 + $0x34] sm:$0xf]
    %v1251 = vld [vmem:[#allocation9 + $0x38] sm:$0xf]
    %v1252 = vld [vmem:[#allocation9 + $0x3c] sm:$0xf]
    %v1253 = vpack.c.bf16 %v1206, %v1205
    %v1254 = vpack.c.bf16 %v1208, %v1207
    %v1255 = vpack.c.bf16 %v1210, %v1209
    %v1256 = vpack.c.bf16 %v1212, %v1211
    %v1257 = vpack.c.bf16 %v1214, %v1213
    %v1258 = vpack.c.bf16 %v1216, %v1215
    %v1259 = vpack.c.bf16 %v1218, %v1217
    %v1260 = vpack.c.bf16 %v1220, %v1219
    %v1261 = vpack.c.bf16 %v1222, %v1221
    %v1262 = vpack.c.bf16 %v1224, %v1223
    %v1263 = vpack.c.bf16 %v1226, %v1225
    %v1264 = vpack.c.bf16 %v1228, %v1227
    %v1265 = vpack.c.bf16 %v1230, %v1229
    %v1266 = vpack.c.bf16 %v1232, %v1231
    %v1267 = vpack.c.bf16 %v1234, %v1233
    %v1268 = vpack.c.bf16 %v1236, %v1235
    %v1269 = vld [vmem:[#allocation8 + $0x1] sm:$0x1]
    %v1270 = vperm.slane %v1269, 0
    %v1287 = vunpack.c.l.b16 %v1237
    %v1288 = vunpack.c.l.b16 %v1238
    %v1289 = vunpack.c.l.b16 %v1239
    %v1290 = vunpack.c.l.b16 %v1240
    %v1291 = vunpack.c.l.b16 %v1241
    %v1292 = vunpack.c.l.b16 %v1242
    %v1293 = vunpack.c.l.b16 %v1243
    %v1294 = vunpack.c.l.b16 %v1244
    %v1295 = vunpack.c.l.b16 %v1245
    %v1296 = vunpack.c.l.b16 %v1246
    %v1297 = vunpack.c.l.b16 %v1247
    %v1298 = vunpack.c.l.b16 %v1248
    %v1299 = vunpack.c.l.b16 %v1249
    %v1300 = vunpack.c.l.b16 %v1250
    %v1301 = vunpack.c.l.b16 %v1251
    %v1302 = vunpack.c.l.b16 %v1252
    %v1303 = vpack.c.b16 %v1288, %v1287
    %v1304 = vpack.c.b16 %v1290, %v1289
    %v1305 = vpack.c.b16 %v1292, %v1291
    %v1306 = vpack.c.b16 %v1294, %v1293
    %v1307 = vpack.c.b16 %v1296, %v1295
    %v1308 = vpack.c.b16 %v1298, %v1297
    %v1309 = vpack.c.b16 %v1300, %v1299
    %v1310 = vpack.c.b16 %v1302, %v1301
    %1319 = vmatpush.bf16.msra.mxu0 %v1310
    %1320 = vmatpush.bf16.msra.mxu0 %v1309
    %1321 = vmatpush.bf16.msra.mxu0 %v1308
    %1322 = vmatpush.bf16.msra.mxu0 %v1307
    %1323 = vmatpush.bf16.msra.mxu0 %v1306
    %1324 = vmatpush.bf16.msra.mxu0 %v1305
    %1325 = vmatpush.bf16.msra.mxu0 %v1304
    %1326 = vmatpush.bf16.msra.mxu0 %v1303
    %1327 = vmatmul.bf16.gmra.mxu0 %v1253
    %v1328 = vpop.f32.mrf.mxu0
    %v1329 = vadd.f32 %v1270, %v1328
    %v1330 = vpop.f32.mrf.mxu0
    %v1331 = vadd.f32 %v1270, %v1330
    %1332 = vmatmul.bf16.gmra.mxu0 %v1254
    %v1333 = vpop.f32.mrf.mxu0
    %v1334 = vadd.f32 %v1270, %v1333
    %v1335 = vpop.f32.mrf.mxu0
    %v1336 = vadd.f32 %v1270, %v1335
    %1337 = vmatmul.bf16.gmra.mxu0 %v1255
    %v1338 = vpop.f32.mrf.mxu0
    %v1339 = vadd.f32 %v1270, %v1338
    %v1340 = vpop.f32.mrf.mxu0
    %v1341 = vadd.f32 %v1270, %v1340
    %1342 = vmatmul.bf16.gmra.mxu0 %v1256
    %v1343 = vpop.f32.mrf.mxu0
    %v1344 = vadd.f32 %v1270, %v1343
    %v1345 = vpop.f32.mrf.mxu0
    %v1346 = vadd.f32 %v1270, %v1345
    %1347 = vmatmul.bf16.gmra.mxu0 %v1257
    %v1348 = vpop.f32.mrf.mxu0
    %v1349 = vadd.f32 %v1270, %v1348
    %v1350 = vpop.f32.mrf.mxu0
    %v1351 = vadd.f32 %v1270, %v1350
    %1352 = vmatmul.bf16.gmra.mxu0 %v1258
    %v1353 = vpop.f32.mrf.mxu0
    %v1354 = vadd.f32 %v1270, %v1353
    %v1355 = vpop.f32.mrf.mxu0
    %v1356 = vadd.f32 %v1270, %v1355
    %1357 = vmatmul.bf16.gmra.mxu0 %v1259
    %v1358 = vpop.f32.mrf.mxu0
    %v1359 = vadd.f32 %v1270, %v1358
    %v1360 = vpop.f32.mrf.mxu0
    %v1361 = vadd.f32 %v1270, %v1360
    %1362 = vmatmul.bf16.gmra.mxu0 %v1260
    %v1363 = vpop.f32.mrf.mxu0
    %v1364 = vadd.f32 %v1270, %v1363
    %v1365 = vpop.f32.mrf.mxu0
    %v1366 = vadd.f32 %v1270, %v1365
    %1367 = vmatmul.bf16.gmra.mxu0 %v1261
    %v1368 = vpop.f32.mrf.mxu0
    %v1369 = vadd.f32 %v1270, %v1368
    %v1370 = vpop.f32.mrf.mxu0
    %v1371 = vadd.f32 %v1270, %v1370
    %1372 = vmatmul.bf16.gmra.mxu0 %v1262
    %v1373 = vpop.f32.mrf.mxu0
    %v1374 = vadd.f32 %v1270, %v1373
    %v1375 = vpop.f32.mrf.mxu0
    %v1376 = vadd.f32 %v1270, %v1375
    %1377 = vmatmul.bf16.gmra.mxu0 %v1263
    %v1378 = vpop.f32.mrf.mxu0
    %v1379 = vadd.f32 %v1270, %v1378
    %v1380 = vpop.f32.mrf.mxu0
    %v1381 = vadd.f32 %v1270, %v1380
    %1382 = vmatmul.bf16.gmra.mxu0 %v1264
    %v1383 = vpop.f32.mrf.mxu0
    %v1384 = vadd.f32 %v1270, %v1383
    %v1385 = vpop.f32.mrf.mxu0
    %v1386 = vadd.f32 %v1270, %v1385
    %1387 = vmatmul.bf16.gmra.mxu0 %v1265
    %v1388 = vpop.f32.mrf.mxu0
    %v1389 = vadd.f32 %v1270, %v1388
    %v1390 = vpop.f32.mrf.mxu0
    %v1391 = vadd.f32 %v1270, %v1390
    %1392 = vmatmul.bf16.gmra.mxu0 %v1266
    %v1393 = vpop.f32.mrf.mxu0
    %v1394 = vadd.f32 %v1270, %v1393
    %v1395 = vpop.f32.mrf.mxu0
    %v1396 = vadd.f32 %v1270, %v1395
    %1397 = vmatmul.bf16.gmra.mxu0 %v1267
    %v1398 = vpop.f32.mrf.mxu0
    %v1399 = vadd.f32 %v1270, %v1398
    %v1400 = vpop.f32.mrf.mxu0
    %v1401 = vadd.f32 %v1270, %v1400
    %1402 = vmatmul.bf16.gmra.mxu0 %v1268
    %v1403 = vpop.f32.mrf.mxu0
    %v1404 = vadd.f32 %v1270, %v1403
    %v1405 = vpop.f32.mrf.mxu0
    %v1406 = vadd.f32 %v1270, %v1405
    %1407 = vdwg.mxu0
    %v1408 = vxor.u32 %v1329, 2147483648
    %v1409 = vxor.u32 %v1331, 2147483648
    %v1410 = vxor.u32 %v1334, 2147483648
    %v1411 = vxor.u32 %v1336, 2147483648
    %v1412 = vxor.u32 %v1339, 2147483648
    %v1413 = vxor.u32 %v1341, 2147483648
    %v1414 = vxor.u32 %v1344, 2147483648
    %v1415 = vxor.u32 %v1346, 2147483648
    %v1416 = vxor.u32 %v1349, 2147483648
    %v1417 = vxor.u32 %v1351, 2147483648
    %v1418 = vxor.u32 %v1354, 2147483648
    %v1419 = vxor.u32 %v1356, 2147483648
    %v1420 = vxor.u32 %v1359, 2147483648
    %v1421 = vxor.u32 %v1361, 2147483648
    %v1422 = vxor.u32 %v1364, 2147483648
    %v1423 = vxor.u32 %v1366, 2147483648
    %v1424 = vxor.u32 %v1369, 2147483648
    %v1425 = vxor.u32 %v1371, 2147483648
    %v1426 = vxor.u32 %v1374, 2147483648
    %v1427 = vxor.u32 %v1376, 2147483648
    %v1428 = vxor.u32 %v1379, 2147483648
    %v1429 = vxor.u32 %v1381, 2147483648
    %v1430 = vxor.u32 %v1384, 2147483648
    %v1431 = vxor.u32 %v1386, 2147483648
    %v1432 = vxor.u32 %v1389, 2147483648
    %v1433 = vxor.u32 %v1391, 2147483648
    %v1434 = vxor.u32 %v1394, 2147483648
    %v1435 = vxor.u32 %v1396, 2147483648
    %v1436 = vxor.u32 %v1399, 2147483648
    %v1437 = vxor.u32 %v1401, 2147483648
    %v1438 = vxor.u32 %v1404, 2147483648
    %v1439 = vxor.u32 %v1406, 2147483648
    %v1440 = vmul.f32 %v1408, 1.442695
    %v1441 = vpow.pop %v1440
    %v1442 = vmul.f32 %v1409, 1.442695
    %v1443 = vpow.pop %v1442
    %v1444 = vmul.f32 %v1410, 1.442695
    %v1445 = vpow.pop %v1444
    %v1446 = vmul.f32 %v1411, 1.442695
    %v1447 = vpow.pop %v1446
    %v1448 = vmul.f32 %v1412, 1.442695
    %v1449 = vpow.pop %v1448
    %v1450 = vmul.f32 %v1413, 1.442695
    %v1451 = vpow.pop %v1450
    %v1452 = vmul.f32 %v1414, 1.442695
    %v1453 = vpow.pop %v1452
    %v1454 = vmul.f32 %v1415, 1.442695
    %v1455 = vpow.pop %v1454
    %v1456 = vmul.f32 %v1416, 1.442695
    %v1457 = vpow.pop %v1456
    %v1458 = vmul.f32 %v1417, 1.442695
    %v1459 = vpow.pop %v1458
    %v1460 = vmul.f32 %v1418, 1.442695
    %v1461 = vpow.pop %v1460
    %v1462 = vmul.f32 %v1419, 1.442695
    %v1463 = vpow.pop %v1462
    %v1464 = vmul.f32 %v1420, 1.442695
    %v1465 = vpow.pop %v1464
    %v1466 = vmul.f32 %v1421, 1.442695
    %v1467 = vpow.pop %v1466
    %v1468 = vmul.f32 %v1422, 1.442695
    %v1469 = vpow.pop %v1468
    %v1470 = vmul.f32 %v1423, 1.442695
    %v1471 = vpow.pop %v1470
    %v1472 = vmul.f32 %v1424, 1.442695
    %v1473 = vpow.pop %v1472
    %v1474 = vmul.f32 %v1425, 1.442695
    %v1475 = vpow.pop %v1474
    %v1476 = vmul.f32 %v1426, 1.442695
    %v1477 = vpow.pop %v1476
    %v1478 = vmul.f32 %v1427, 1.442695
    %v1479 = vpow.pop %v1478
    %v1480 = vmul.f32 %v1428, 1.442695
    %v1481 = vpow.pop %v1480
    %v1482 = vmul.f32 %v1429, 1.442695
    %v1483 = vpow.pop %v1482
    %v1484 = vmul.f32 %v1430, 1.442695
    %v1485 = vpow.pop %v1484
    %v1486 = vmul.f32 %v1431, 1.442695
    %v1487 = vpow.pop %v1486
    %v1488 = vmul.f32 %v1432, 1.442695
    %v1489 = vpow.pop %v1488
    %v1490 = vmul.f32 %v1433, 1.442695
    %v1491 = vpow.pop %v1490
    %v1492 = vmul.f32 %v1434, 1.442695
    %v1493 = vpow.pop %v1492
    %v1494 = vmul.f32 %v1435, 1.442695
    %v1495 = vpow.pop %v1494
    %v1496 = vmul.f32 %v1436, 1.442695
    %v1497 = vpow.pop %v1496
    %v1498 = vmul.f32 %v1437, 1.442695
    %v1499 = vpow.pop %v1498
    %v1500 = vmul.f32 %v1438, 1.442695
    %v1501 = vpow.pop %v1500
    %v1502 = vmul.f32 %v1439, 1.442695
    %v1503 = vpow.pop %v1502
    %v1504 = vadd.f32 %v1441, 1.0
    %v1505 = vadd.f32 %v1443, 1.0
    %v1506 = vadd.f32 %v1445, 1.0
    %v1507 = vadd.f32 %v1447, 1.0
    %v1508 = vadd.f32 %v1449, 1.0
    %v1509 = vadd.f32 %v1451, 1.0
    %v1510 = vadd.f32 %v1453, 1.0
    %v1511 = vadd.f32 %v1455, 1.0
    %v1512 = vadd.f32 %v1457, 1.0
    %v1513 = vadd.f32 %v1459, 1.0
    %v1514 = vadd.f32 %v1461, 1.0
    %v1515 = vadd.f32 %v1463, 1.0
    %v1516 = vadd.f32 %v1465, 1.0
    %v1517 = vadd.f32 %v1467, 1.0
    %v1518 = vadd.f32 %v1469, 1.0
    %v1519 = vadd.f32 %v1471, 1.0
    %v1520 = vadd.f32 %v1473, 1.0
    %v1521 = vadd.f32 %v1475, 1.0
    %v1522 = vadd.f32 %v1477, 1.0
    %v1523 = vadd.f32 %v1479, 1.0
    %v1524 = vadd.f32 %v1481, 1.0
    %v1525 = vadd.f32 %v1483, 1.0
    %v1526 = vadd.f32 %v1485, 1.0
    %v1527 = vadd.f32 %v1487, 1.0
    %v1528 = vadd.f32 %v1489, 1.0
    %v1529 = vadd.f32 %v1491, 1.0
    %v1530 = vadd.f32 %v1493, 1.0
    %v1531 = vadd.f32 %v1495, 1.0
    %v1532 = vadd.f32 %v1497, 1.0
    %v1533 = vadd.f32 %v1499, 1.0
    %v1534 = vadd.f32 %v1501, 1.0
    %v1535 = vadd.f32 %v1503, 1.0
    %v1536 = vrcp.pop %v1504
    %v1537 = vmul.f32 %v1504, %v1536
    %v1538 = vsub.f32 1.0, %v1537
    %v1539 = vmul.f32 %v1536, %v1538
    %v1540 = vadd.f32 %v1536, %v1539
    %vm1541 = vweird.f32 %v1504
    %vm1542 = vweird.f32 %v1536
    %vm1543 = vmor %vm1541, %vm1542
    %v1544 = vsel %vm1543, %v1536, %v1540
    %v1545 = vand.u32 2147483647, %v1504
    %vm1546 = vcmp.eq.f32.partialorder %v1545, 8.507059e+37
    %v1547 = vand.u32 %v1504, 2147483648
    %v1548 = vor.u32 1.1754944e-38, %v1547
    %v1549 = vsel %vm1546, %v1548, %v1544
    %v1550 = vmul.f32 1.0, %v1549
    %v1551 = vrcp.pop %v1505
    %v1552 = vmul.f32 %v1505, %v1551
    %v1553 = vsub.f32 1.0, %v1552
    %v1554 = vmul.f32 %v1551, %v1553
    %v1555 = vadd.f32 %v1551, %v1554
    %vm1556 = vweird.f32 %v1505
    %vm1557 = vweird.f32 %v1551
    %vm1558 = vmor %vm1556, %vm1557
    %v1559 = vsel %vm1558, %v1551, %v1555
    %v1560 = vand.u32 2147483647, %v1505
    %vm1561 = vcmp.eq.f32.partialorder %v1560, 8.507059e+37
    %v1562 = vand.u32 %v1505, 2147483648
    %v1563 = vor.u32 1.1754944e-38, %v1562
    %v1564 = vsel %vm1561, %v1563, %v1559
    %v1565 = vmul.f32 1.0, %v1564
    %v1566 = vrcp.pop %v1506
    %v1567 = vmul.f32 %v1506, %v1566
    %v1568 = vsub.f32 1.0, %v1567
    %v1569 = vmul.f32 %v1566, %v1568
    %v1570 = vadd.f32 %v1566, %v1569
    %vm1571 = vweird.f32 %v1506
    %vm1572 = vweird.f32 %v1566
    %vm1573 = vmor %vm1571, %vm1572
    %v1574 = vsel %vm1573, %v1566, %v1570
    %v1575 = vand.u32 2147483647, %v1506
    %vm1576 = vcmp.eq.f32.partialorder %v1575, 8.507059e+37
    %v1577 = vand.u32 %v1506, 2147483648
    %v1578 = vor.u32 1.1754944e-38, %v1577
    %v1579 = vsel %vm1576, %v1578, %v1574
    %v1580 = vmul.f32 1.0, %v1579
    %v1581 = vrcp.pop %v1507
    %v1582 = vmul.f32 %v1507, %v1581
    %v1583 = vsub.f32 1.0, %v1582
    %v1584 = vmul.f32 %v1581, %v1583
    %v1585 = vadd.f32 %v1581, %v1584
    %vm1586 = vweird.f32 %v1507
    %vm1587 = vweird.f32 %v1581
    %vm1588 = vmor %vm1586, %vm1587
    %v1589 = vsel %vm1588, %v1581, %v1585
    %v1590 = vand.u32 2147483647, %v1507
    %vm1591 = vcmp.eq.f32.partialorder %v1590, 8.507059e+37
    %v1592 = vand.u32 %v1507, 2147483648
    %v1593 = vor.u32 1.1754944e-38, %v1592
    %v1594 = vsel %vm1591, %v1593, %v1589
    %v1595 = vmul.f32 1.0, %v1594
    %v1596 = vrcp.pop %v1508
    %v1597 = vmul.f32 %v1508, %v1596
    %v1598 = vsub.f32 1.0, %v1597
    %v1599 = vmul.f32 %v1596, %v1598
    %v1600 = vadd.f32 %v1596, %v1599
    %vm1601 = vweird.f32 %v1508
    %vm1602 = vweird.f32 %v1596
    %vm1603 = vmor %vm1601, %vm1602
    %v1604 = vsel %vm1603, %v1596, %v1600
    %v1605 = vand.u32 2147483647, %v1508
    %vm1606 = vcmp.eq.f32.partialorder %v1605, 8.507059e+37
    %v1607 = vand.u32 %v1508, 2147483648
    %v1608 = vor.u32 1.1754944e-38, %v1607
    %v1609 = vsel %vm1606, %v1608, %v1604
    %v1610 = vmul.f32 1.0, %v1609
    %v1611 = vrcp.pop %v1509
    %v1612 = vmul.f32 %v1509, %v1611
    %v1613 = vsub.f32 1.0, %v1612
    %v1614 = vmul.f32 %v1611, %v1613
    %v1615 = vadd.f32 %v1611, %v1614
    %vm1616 = vweird.f32 %v1509
    %vm1617 = vweird.f32 %v1611
    %vm1618 = vmor %vm1616, %vm1617
    %v1619 = vsel %vm1618, %v1611, %v1615
    %v1620 = vand.u32 2147483647, %v1509
    %vm1621 = vcmp.eq.f32.partialorder %v1620, 8.507059e+37
    %v1622 = vand.u32 %v1509, 2147483648
    %v1623 = vor.u32 1.1754944e-38, %v1622
    %v1624 = vsel %vm1621, %v1623, %v1619
    %v1625 = vmul.f32 1.0, %v1624
    %v1626 = vrcp.pop %v1510
    %v1627 = vmul.f32 %v1510, %v1626
    %v1628 = vsub.f32 1.0, %v1627
    %v1629 = vmul.f32 %v1626, %v1628
    %v1630 = vadd.f32 %v1626, %v1629
    %vm1631 = vweird.f32 %v1510
    %vm1632 = vweird.f32 %v1626
    %vm1633 = vmor %vm1631, %vm1632
    %v1634 = vsel %vm1633, %v1626, %v1630
    %v1635 = vand.u32 2147483647, %v1510
    %vm1636 = vcmp.eq.f32.partialorder %v1635, 8.507059e+37
    %v1637 = vand.u32 %v1510, 2147483648
    %v1638 = vor.u32 1.1754944e-38, %v1637
    %v1639 = vsel %vm1636, %v1638, %v1634
    %v1640 = vmul.f32 1.0, %v1639
    %v1641 = vrcp.pop %v1511
    %v1642 = vmul.f32 %v1511, %v1641
    %v1643 = vsub.f32 1.0, %v1642
    %v1644 = vmul.f32 %v1641, %v1643
    %v1645 = vadd.f32 %v1641, %v1644
    %vm1646 = vweird.f32 %v1511
    %vm1647 = vweird.f32 %v1641
    %vm1648 = vmor %vm1646, %vm1647
    %v1649 = vsel %vm1648, %v1641, %v1645
    %v1650 = vand.u32 2147483647, %v1511
    %vm1651 = vcmp.eq.f32.partialorder %v1650, 8.507059e+37
    %v1652 = vand.u32 %v1511, 2147483648
    %v1653 = vor.u32 1.1754944e-38, %v1652
    %v1654 = vsel %vm1651, %v1653, %v1649
    %v1655 = vmul.f32 1.0, %v1654
    %v1656 = vrcp.pop %v1512
    %v1657 = vmul.f32 %v1512, %v1656
    %v1658 = vsub.f32 1.0, %v1657
    %v1659 = vmul.f32 %v1656, %v1658
    %v1660 = vadd.f32 %v1656, %v1659
    %vm1661 = vweird.f32 %v1512
    %vm1662 = vweird.f32 %v1656
    %vm1663 = vmor %vm1661, %vm1662
    %v1664 = vsel %vm1663, %v1656, %v1660
    %v1665 = vand.u32 2147483647, %v1512
    %vm1666 = vcmp.eq.f32.partialorder %v1665, 8.507059e+37
    %v1667 = vand.u32 %v1512, 2147483648
    %v1668 = vor.u32 1.1754944e-38, %v1667
    %v1669 = vsel %vm1666, %v1668, %v1664
    %v1670 = vmul.f32 1.0, %v1669
    %v1671 = vrcp.pop %v1513
    %v1672 = vmul.f32 %v1513, %v1671
    %v1673 = vsub.f32 1.0, %v1672
    %v1674 = vmul.f32 %v1671, %v1673
    %v1675 = vadd.f32 %v1671, %v1674
    %vm1676 = vweird.f32 %v1513
    %vm1677 = vweird.f32 %v1671
    %vm1678 = vmor %vm1676, %vm1677
    %v1679 = vsel %vm1678, %v1671, %v1675
    %v1680 = vand.u32 2147483647, %v1513
    %vm1681 = vcmp.eq.f32.partialorder %v1680, 8.507059e+37
    %v1682 = vand.u32 %v1513, 2147483648
    %v1683 = vor.u32 1.1754944e-38, %v1682
    %v1684 = vsel %vm1681, %v1683, %v1679
    %v1685 = vmul.f32 1.0, %v1684
    %v1686 = vrcp.pop %v1514
    %v1687 = vmul.f32 %v1514, %v1686
    %v1688 = vsub.f32 1.0, %v1687
    %v1689 = vmul.f32 %v1686, %v1688
    %v1690 = vadd.f32 %v1686, %v1689
    %vm1691 = vweird.f32 %v1514
    %vm1692 = vweird.f32 %v1686
    %vm1693 = vmor %vm1691, %vm1692
    %v1694 = vsel %vm1693, %v1686, %v1690
    %v1695 = vand.u32 2147483647, %v1514
    %vm1696 = vcmp.eq.f32.partialorder %v1695, 8.507059e+37
    %v1697 = vand.u32 %v1514, 2147483648
    %v1698 = vor.u32 1.1754944e-38, %v1697
    %v1699 = vsel %vm1696, %v1698, %v1694
    %v1700 = vmul.f32 1.0, %v1699
    %v1701 = vrcp.pop %v1515
    %v1702 = vmul.f32 %v1515, %v1701
    %v1703 = vsub.f32 1.0, %v1702
    %v1704 = vmul.f32 %v1701, %v1703
    %v1705 = vadd.f32 %v1701, %v1704
    %vm1706 = vweird.f32 %v1515
    %vm1707 = vweird.f32 %v1701
    %vm1708 = vmor %vm1706, %vm1707
    %v1709 = vsel %vm1708, %v1701, %v1705
    %v1710 = vand.u32 2147483647, %v1515
    %vm1711 = vcmp.eq.f32.partialorder %v1710, 8.507059e+37
    %v1712 = vand.u32 %v1515, 2147483648
    %v1713 = vor.u32 1.1754944e-38, %v1712
    %v1714 = vsel %vm1711, %v1713, %v1709
    %v1715 = vmul.f32 1.0, %v1714
    %v1716 = vrcp.pop %v1516
    %v1717 = vmul.f32 %v1516, %v1716
    %v1718 = vsub.f32 1.0, %v1717
    %v1719 = vmul.f32 %v1716, %v1718
    %v1720 = vadd.f32 %v1716, %v1719
    %vm1721 = vweird.f32 %v1516
    %vm1722 = vweird.f32 %v1716
    %vm1723 = vmor %vm1721, %vm1722
    %v1724 = vsel %vm1723, %v1716, %v1720
    %v1725 = vand.u32 2147483647, %v1516
    %vm1726 = vcmp.eq.f32.partialorder %v1725, 8.507059e+37
    %v1727 = vand.u32 %v1516, 2147483648
    %v1728 = vor.u32 1.1754944e-38, %v1727
    %v1729 = vsel %vm1726, %v1728, %v1724
    %v1730 = vmul.f32 1.0, %v1729
    %v1731 = vrcp.pop %v1517
    %v1732 = vmul.f32 %v1517, %v1731
    %v1733 = vsub.f32 1.0, %v1732
    %v1734 = vmul.f32 %v1731, %v1733
    %v1735 = vadd.f32 %v1731, %v1734
    %vm1736 = vweird.f32 %v1517
    %vm1737 = vweird.f32 %v1731
    %vm1738 = vmor %vm1736, %vm1737
    %v1739 = vsel %vm1738, %v1731, %v1735
    %v1740 = vand.u32 2147483647, %v1517
    %vm1741 = vcmp.eq.f32.partialorder %v1740, 8.507059e+37
    %v1742 = vand.u32 %v1517, 2147483648
    %v1743 = vor.u32 1.1754944e-38, %v1742
    %v1744 = vsel %vm1741, %v1743, %v1739
    %v1745 = vmul.f32 1.0, %v1744
    %v1746 = vrcp.pop %v1518
    %v1747 = vmul.f32 %v1518, %v1746
    %v1748 = vsub.f32 1.0, %v1747
    %v1749 = vmul.f32 %v1746, %v1748
    %v1750 = vadd.f32 %v1746, %v1749
    %vm1751 = vweird.f32 %v1518
    %vm1752 = vweird.f32 %v1746
    %vm1753 = vmor %vm1751, %vm1752
    %v1754 = vsel %vm1753, %v1746, %v1750
    %v1755 = vand.u32 2147483647, %v1518
    %vm1756 = vcmp.eq.f32.partialorder %v1755, 8.507059e+37
    %v1757 = vand.u32 %v1518, 2147483648
    %v1758 = vor.u32 1.1754944e-38, %v1757
    %v1759 = vsel %vm1756, %v1758, %v1754
    %v1760 = vmul.f32 1.0, %v1759
    %v1761 = vrcp.pop %v1519
    %v1762 = vmul.f32 %v1519, %v1761
    %v1763 = vsub.f32 1.0, %v1762
    %v1764 = vmul.f32 %v1761, %v1763
    %v1765 = vadd.f32 %v1761, %v1764
    %vm1766 = vweird.f32 %v1519
    %vm1767 = vweird.f32 %v1761
    %vm1768 = vmor %vm1766, %vm1767
    %v1769 = vsel %vm1768, %v1761, %v1765
    %v1770 = vand.u32 2147483647, %v1519
    %vm1771 = vcmp.eq.f32.partialorder %v1770, 8.507059e+37
    %v1772 = vand.u32 %v1519, 2147483648
    %v1773 = vor.u32 1.1754944e-38, %v1772
    %v1774 = vsel %vm1771, %v1773, %v1769
    %v1775 = vmul.f32 1.0, %v1774
    %v1776 = vrcp.pop %v1520
    %v1777 = vmul.f32 %v1520, %v1776
    %v1778 = vsub.f32 1.0, %v1777
    %v1779 = vmul.f32 %v1776, %v1778
    %v1780 = vadd.f32 %v1776, %v1779
    %vm1781 = vweird.f32 %v1520
    %vm1782 = vweird.f32 %v1776
    %vm1783 = vmor %vm1781, %vm1782
    %v1784 = vsel %vm1783, %v1776, %v1780
    %v1785 = vand.u32 2147483647, %v1520
    %vm1786 = vcmp.eq.f32.partialorder %v1785, 8.507059e+37
    %v1787 = vand.u32 %v1520, 2147483648
    %v1788 = vor.u32 1.1754944e-38, %v1787
    %v1789 = vsel %vm1786, %v1788, %v1784
    %v1790 = vmul.f32 1.0, %v1789
    %v1791 = vrcp.pop %v1521
    %v1792 = vmul.f32 %v1521, %v1791
    %v1793 = vsub.f32 1.0, %v1792
    %v1794 = vmul.f32 %v1791, %v1793
    %v1795 = vadd.f32 %v1791, %v1794
    %vm1796 = vweird.f32 %v1521
    %vm1797 = vweird.f32 %v1791
    %vm1798 = vmor %vm1796, %vm1797
    %v1799 = vsel %vm1798, %v1791, %v1795
    %v1800 = vand.u32 2147483647, %v1521
    %vm1801 = vcmp.eq.f32.partialorder %v1800, 8.507059e+37
    %v1802 = vand.u32 %v1521, 2147483648
    %v1803 = vor.u32 1.1754944e-38, %v1802
    %v1804 = vsel %vm1801, %v1803, %v1799
    %v1805 = vmul.f32 1.0, %v1804
    %v1806 = vrcp.pop %v1522
    %v1807 = vmul.f32 %v1522, %v1806
    %v1808 = vsub.f32 1.0, %v1807
    %v1809 = vmul.f32 %v1806, %v1808
    %v1810 = vadd.f32 %v1806, %v1809
    %vm1811 = vweird.f32 %v1522
    %vm1812 = vweird.f32 %v1806
    %vm1813 = vmor %vm1811, %vm1812
    %v1814 = vsel %vm1813, %v1806, %v1810
    %v1815 = vand.u32 2147483647, %v1522
    %vm1816 = vcmp.eq.f32.partialorder %v1815, 8.507059e+37
    %v1817 = vand.u32 %v1522, 2147483648
    %v1818 = vor.u32 1.1754944e-38, %v1817
    %v1819 = vsel %vm1816, %v1818, %v1814
    %v1820 = vmul.f32 1.0, %v1819
    %v1821 = vrcp.pop %v1523
    %v1822 = vmul.f32 %v1523, %v1821
    %v1823 = vsub.f32 1.0, %v1822
    %v1824 = vmul.f32 %v1821, %v1823
    %v1825 = vadd.f32 %v1821, %v1824
    %vm1826 = vweird.f32 %v1523
    %vm1827 = vweird.f32 %v1821
    %vm1828 = vmor %vm1826, %vm1827
    %v1829 = vsel %vm1828, %v1821, %v1825
    %v1830 = vand.u32 2147483647, %v1523
    %vm1831 = vcmp.eq.f32.partialorder %v1830, 8.507059e+37
    %v1832 = vand.u32 %v1523, 2147483648
    %v1833 = vor.u32 1.1754944e-38, %v1832
    %v1834 = vsel %vm1831, %v1833, %v1829
    %v1835 = vmul.f32 1.0, %v1834
    %v1836 = vrcp.pop %v1524
    %v1837 = vmul.f32 %v1524, %v1836
    %v1838 = vsub.f32 1.0, %v1837
    %v1839 = vmul.f32 %v1836, %v1838
    %v1840 = vadd.f32 %v1836, %v1839
    %vm1841 = vweird.f32 %v1524
    %vm1842 = vweird.f32 %v1836
    %vm1843 = vmor %vm1841, %vm1842
    %v1844 = vsel %vm1843, %v1836, %v1840
    %v1845 = vand.u32 2147483647, %v1524
    %vm1846 = vcmp.eq.f32.partialorder %v1845, 8.507059e+37
    %v1847 = vand.u32 %v1524, 2147483648
    %v1848 = vor.u32 1.1754944e-38, %v1847
    %v1849 = vsel %vm1846, %v1848, %v1844
    %v1850 = vmul.f32 1.0, %v1849
    %v1851 = vrcp.pop %v1525
    %v1852 = vmul.f32 %v1525, %v1851
    %v1853 = vsub.f32 1.0, %v1852
    %v1854 = vmul.f32 %v1851, %v1853
    %v1855 = vadd.f32 %v1851, %v1854
    %vm1856 = vweird.f32 %v1525
    %vm1857 = vweird.f32 %v1851
    %vm1858 = vmor %vm1856, %vm1857
    %v1859 = vsel %vm1858, %v1851, %v1855
    %v1860 = vand.u32 2147483647, %v1525
    %vm1861 = vcmp.eq.f32.partialorder %v1860, 8.507059e+37
    %v1862 = vand.u32 %v1525, 2147483648
    %v1863 = vor.u32 1.1754944e-38, %v1862
    %v1864 = vsel %vm1861, %v1863, %v1859
    %v1865 = vmul.f32 1.0, %v1864
    %v1866 = vrcp.pop %v1526
    %v1867 = vmul.f32 %v1526, %v1866
    %v1868 = vsub.f32 1.0, %v1867
    %v1869 = vmul.f32 %v1866, %v1868
    %v1870 = vadd.f32 %v1866, %v1869
    %vm1871 = vweird.f32 %v1526
    %vm1872 = vweird.f32 %v1866
    %vm1873 = vmor %vm1871, %vm1872
    %v1874 = vsel %vm1873, %v1866, %v1870
    %v1875 = vand.u32 2147483647, %v1526
    %vm1876 = vcmp.eq.f32.partialorder %v1875, 8.507059e+37
    %v1877 = vand.u32 %v1526, 2147483648
    %v1878 = vor.u32 1.1754944e-38, %v1877
    %v1879 = vsel %vm1876, %v1878, %v1874
    %v1880 = vmul.f32 1.0, %v1879
    %v1881 = vrcp.pop %v1527
    %v1882 = vmul.f32 %v1527, %v1881
    %v1883 = vsub.f32 1.0, %v1882
    %v1884 = vmul.f32 %v1881, %v1883
    %v1885 = vadd.f32 %v1881, %v1884
    %vm1886 = vweird.f32 %v1527
    %vm1887 = vweird.f32 %v1881
    %vm1888 = vmor %vm1886, %vm1887
    %v1889 = vsel %vm1888, %v1881, %v1885
    %v1890 = vand.u32 2147483647, %v1527
    %vm1891 = vcmp.eq.f32.partialorder %v1890, 8.507059e+37
    %v1892 = vand.u32 %v1527, 2147483648
    %v1893 = vor.u32 1.1754944e-38, %v1892
    %v1894 = vsel %vm1891, %v1893, %v1889
    %v1895 = vmul.f32 1.0, %v1894
    %v1896 = vrcp.pop %v1528
    %v1897 = vmul.f32 %v1528, %v1896
    %v1898 = vsub.f32 1.0, %v1897
    %v1899 = vmul.f32 %v1896, %v1898
    %v1900 = vadd.f32 %v1896, %v1899
    %vm1901 = vweird.f32 %v1528
    %vm1902 = vweird.f32 %v1896
    %vm1903 = vmor %vm1901, %vm1902
    %v1904 = vsel %vm1903, %v1896, %v1900
    %v1905 = vand.u32 2147483647, %v1528
    %vm1906 = vcmp.eq.f32.partialorder %v1905, 8.507059e+37
    %v1907 = vand.u32 %v1528, 2147483648
    %v1908 = vor.u32 1.1754944e-38, %v1907
    %v1909 = vsel %vm1906, %v1908, %v1904
    %v1910 = vmul.f32 1.0, %v1909
    %v1911 = vrcp.pop %v1529
    %v1912 = vmul.f32 %v1529, %v1911
    %v1913 = vsub.f32 1.0, %v1912
    %v1914 = vmul.f32 %v1911, %v1913
    %v1915 = vadd.f32 %v1911, %v1914
    %vm1916 = vweird.f32 %v1529
    %vm1917 = vweird.f32 %v1911
    %vm1918 = vmor %vm1916, %vm1917
    %v1919 = vsel %vm1918, %v1911, %v1915
    %v1920 = vand.u32 2147483647, %v1529
    %vm1921 = vcmp.eq.f32.partialorder %v1920, 8.507059e+37
    %v1922 = vand.u32 %v1529, 2147483648
    %v1923 = vor.u32 1.1754944e-38, %v1922
    %v1924 = vsel %vm1921, %v1923, %v1919
    %v1925 = vmul.f32 1.0, %v1924
    %v1926 = vrcp.pop %v1530
    %v1927 = vmul.f32 %v1530, %v1926
    %v1928 = vsub.f32 1.0, %v1927
    %v1929 = vmul.f32 %v1926, %v1928
    %v1930 = vadd.f32 %v1926, %v1929
    %vm1931 = vweird.f32 %v1530
    %vm1932 = vweird.f32 %v1926
    %vm1933 = vmor %vm1931, %vm1932
    %v1934 = vsel %vm1933, %v1926, %v1930
    %v1935 = vand.u32 2147483647, %v1530
    %vm1936 = vcmp.eq.f32.partialorder %v1935, 8.507059e+37
    %v1937 = vand.u32 %v1530, 2147483648
    %v1938 = vor.u32 1.1754944e-38, %v1937
    %v1939 = vsel %vm1936, %v1938, %v1934
    %v1940 = vmul.f32 1.0, %v1939
    %v1941 = vrcp.pop %v1531
    %v1942 = vmul.f32 %v1531, %v1941
    %v1943 = vsub.f32 1.0, %v1942
    %v1944 = vmul.f32 %v1941, %v1943
    %v1945 = vadd.f32 %v1941, %v1944
    %vm1946 = vweird.f32 %v1531
    %vm1947 = vweird.f32 %v1941
    %vm1948 = vmor %vm1946, %vm1947
    %v1949 = vsel %vm1948, %v1941, %v1945
    %v1950 = vand.u32 2147483647, %v1531
    %vm1951 = vcmp.eq.f32.partialorder %v1950, 8.507059e+37
    %v1952 = vand.u32 %v1531, 2147483648
    %v1953 = vor.u32 1.1754944e-38, %v1952
    %v1954 = vsel %vm1951, %v1953, %v1949
    %v1955 = vmul.f32 1.0, %v1954
    %v1956 = vrcp.pop %v1532
    %v1957 = vmul.f32 %v1532, %v1956
    %v1958 = vsub.f32 1.0, %v1957
    %v1959 = vmul.f32 %v1956, %v1958
    %v1960 = vadd.f32 %v1956, %v1959
    %vm1961 = vweird.f32 %v1532
    %vm1962 = vweird.f32 %v1956
    %vm1963 = vmor %vm1961, %vm1962
    %v1964 = vsel %vm1963, %v1956, %v1960
    %v1965 = vand.u32 2147483647, %v1532
    %vm1966 = vcmp.eq.f32.partialorder %v1965, 8.507059e+37
    %v1967 = vand.u32 %v1532, 2147483648
    %v1968 = vor.u32 1.1754944e-38, %v1967
    %v1969 = vsel %vm1966, %v1968, %v1964
    %v1970 = vmul.f32 1.0, %v1969
    %v1971 = vrcp.pop %v1533
    %v1972 = vmul.f32 %v1533, %v1971
    %v1973 = vsub.f32 1.0, %v1972
    %v1974 = vmul.f32 %v1971, %v1973
    %v1975 = vadd.f32 %v1971, %v1974
    %vm1976 = vweird.f32 %v1533
    %vm1977 = vweird.f32 %v1971
    %vm1978 = vmor %vm1976, %vm1977
    %v1979 = vsel %vm1978, %v1971, %v1975
    %v1980 = vand.u32 2147483647, %v1533
    %vm1981 = vcmp.eq.f32.partialorder %v1980, 8.507059e+37
    %v1982 = vand.u32 %v1533, 2147483648
    %v1983 = vor.u32 1.1754944e-38, %v1982
    %v1984 = vsel %vm1981, %v1983, %v1979
    %v1985 = vmul.f32 1.0, %v1984
    %v1986 = vrcp.pop %v1534
    %v1987 = vmul.f32 %v1534, %v1986
    %v1988 = vsub.f32 1.0, %v1987
    %v1989 = vmul.f32 %v1986, %v1988
    %v1990 = vadd.f32 %v1986, %v1989
    %vm1991 = vweird.f32 %v1534
    %vm1992 = vweird.f32 %v1986
    %vm1993 = vmor %vm1991, %vm1992
    %v1994 = vsel %vm1993, %v1986, %v1990
    %v1995 = vand.u32 2147483647, %v1534
    %vm1996 = vcmp.eq.f32.partialorder %v1995, 8.507059e+37
    %v1997 = vand.u32 %v1534, 2147483648
    %v1998 = vor.u32 1.1754944e-38, %v1997
    %v1999 = vsel %vm1996, %v1998, %v1994
    %v2000 = vmul.f32 1.0, %v1999
    %v2001 = vrcp.pop %v1535
    %v2002 = vmul.f32 %v1535, %v2001
    %v2003 = vsub.f32 1.0, %v2002
    %v2004 = vmul.f32 %v2001, %v2003
    %v2005 = vadd.f32 %v2001, %v2004
    %vm2006 = vweird.f32 %v1535
    %vm2007 = vweird.f32 %v2001
    %vm2008 = vmor %vm2006, %vm2007
    %v2009 = vsel %vm2008, %v2001, %v2005
    %v2010 = vand.u32 2147483647, %v1535
    %vm2011 = vcmp.eq.f32.partialorder %v2010, 8.507059e+37
    %v2012 = vand.u32 %v1535, 2147483648
    %v2013 = vor.u32 1.1754944e-38, %v2012
    %v2014 = vsel %vm2011, %v2013, %v2009
    %v2015 = vmul.f32 1.0, %v2014
    %v2016 = vmul.f32 %v1329, %v1550
    %v2017 = vmul.f32 %v1331, %v1565
    %v2018 = vmul.f32 %v1334, %v1580
    %v2019 = vmul.f32 %v1336, %v1595
    %v2020 = vmul.f32 %v1339, %v1610
    %v2021 = vmul.f32 %v1341, %v1625
    %v2022 = vmul.f32 %v1344, %v1640
    %v2023 = vmul.f32 %v1346, %v1655
    %v2024 = vmul.f32 %v1349, %v1670
    %v2025 = vmul.f32 %v1351, %v1685
    %v2026 = vmul.f32 %v1354, %v1700
    %v2027 = vmul.f32 %v1356, %v1715
    %v2028 = vmul.f32 %v1359, %v1730
    %v2029 = vmul.f32 %v1361, %v1745
    %v2030 = vmul.f32 %v1364, %v1760
    %v2031 = vmul.f32 %v1366, %v1775
    %v2032 = vmul.f32 %v1369, %v1790
    %v2033 = vmul.f32 %v1371, %v1805
    %v2034 = vmul.f32 %v1374, %v1820
    %v2035 = vmul.f32 %v1376, %v1835
    %v2036 = vmul.f32 %v1379, %v1850
    %v2037 = vmul.f32 %v1381, %v1865
    %v2038 = vmul.f32 %v1384, %v1880
    %v2039 = vmul.f32 %v1386, %v1895
    %v2040 = vmul.f32 %v1389, %v1910
    %v2041 = vmul.f32 %v1391, %v1925
    %v2042 = vmul.f32 %v1394, %v1940
    %v2043 = vmul.f32 %v1396, %v1955
    %v2044 = vmul.f32 %v1399, %v1970
    %v2045 = vmul.f32 %v1401, %v1985
    %v2046 = vmul.f32 %v1404, %v2000
    %v2047 = vmul.f32 %v1406, %v2015
    %v2048 = vmul.f32 %v2016, 0.909
    %v2049 = vmul.f32 %v2017, 0.909
    %v2050 = vmul.f32 %v2018, 0.909
    %v2051 = vmul.f32 %v2019, 0.909
    %v2052 = vmul.f32 %v2020, 0.909
    %v2053 = vmul.f32 %v2021, 0.909
    %v2054 = vmul.f32 %v2022, 0.909
    %v2055 = vmul.f32 %v2023, 0.909
    %v2056 = vmul.f32 %v2024, 0.909
    %v2057 = vmul.f32 %v2025, 0.909
    %v2058 = vmul.f32 %v2026, 0.909
    %v2059 = vmul.f32 %v2027, 0.909
    %v2060 = vmul.f32 %v2028, 0.909
    %v2061 = vmul.f32 %v2029, 0.909
    %v2062 = vmul.f32 %v2030, 0.909
    %v2063 = vmul.f32 %v2031, 0.909
    %v2064 = vmul.f32 %v2032, 0.909
    %v2065 = vmul.f32 %v2033, 0.909
    %v2066 = vmul.f32 %v2034, 0.909
    %v2067 = vmul.f32 %v2035, 0.909
    %v2068 = vmul.f32 %v2036, 0.909
    %v2069 = vmul.f32 %v2037, 0.909
    %v2070 = vmul.f32 %v2038, 0.909
    %v2071 = vmul.f32 %v2039, 0.909
    %v2072 = vmul.f32 %v2040, 0.909
    %v2073 = vmul.f32 %v2041, 0.909
    %v2074 = vmul.f32 %v2042, 0.909
    %v2075 = vmul.f32 %v2043, 0.909
    %v2076 = vmul.f32 %v2044, 0.909
    %v2077 = vmul.f32 %v2045, 0.909
    %v2078 = vmul.f32 %v2046, 0.909
    %v2079 = vmul.f32 %v2047, 0.909
    %v2080 = vld [vmem:[#allocation11] sm:$0xf]
    %v2081 = vld [vmem:[#allocation11 + $0x4] sm:$0xf]
    %v2082 = vld [vmem:[#allocation11 + $0x8] sm:$0xf]
    %v2083 = vld [vmem:[#allocation11 + $0xc] sm:$0xf]
    %v2084 = vld [vmem:[#allocation11 + $0x10] sm:$0xf]
    %v2085 = vld [vmem:[#allocation11 + $0x14] sm:$0xf]
    %v2086 = vld [vmem:[#allocation11 + $0x18] sm:$0xf]
    %v2087 = vld [vmem:[#allocation11 + $0x1c] sm:$0xf]
    %v2088 = vld [vmem:[#allocation11 + $0x20] sm:$0xf]
    %v2089 = vld [vmem:[#allocation11 + $0x24] sm:$0xf]
    %v2090 = vld [vmem:[#allocation11 + $0x28] sm:$0xf]
    %v2091 = vld [vmem:[#allocation11 + $0x2c] sm:$0xf]
    %v2092 = vld [vmem:[#allocation11 + $0x30] sm:$0xf]
    %v2093 = vld [vmem:[#allocation11 + $0x34] sm:$0xf]
    %v2094 = vld [vmem:[#allocation11 + $0x38] sm:$0xf]
    %v2095 = vld [vmem:[#allocation11 + $0x3c] sm:$0xf]
    %v2096 = vpack.c.bf16 %v2049, %v2048
    %v2097 = vpack.c.bf16 %v2051, %v2050
    %v2098 = vpack.c.bf16 %v2053, %v2052
    %v2099 = vpack.c.bf16 %v2055, %v2054
    %v2100 = vpack.c.bf16 %v2057, %v2056
    %v2101 = vpack.c.bf16 %v2059, %v2058
    %v2102 = vpack.c.bf16 %v2061, %v2060
    %v2103 = vpack.c.bf16 %v2063, %v2062
    %v2104 = vpack.c.bf16 %v2065, %v2064
    %v2105 = vpack.c.bf16 %v2067, %v2066
    %v2106 = vpack.c.bf16 %v2069, %v2068
    %v2107 = vpack.c.bf16 %v2071, %v2070
    %v2108 = vpack.c.bf16 %v2073, %v2072
    %v2109 = vpack.c.bf16 %v2075, %v2074
    %v2110 = vpack.c.bf16 %v2077, %v2076
    %v2111 = vpack.c.bf16 %v2079, %v2078
    %v2112 = vld [vmem:[#allocation8 + $0x2] sm:$0x1]
    %v2113 = vperm.slane %v2112, 0
    %v2130 = vunpack.c.l.b16 %v2080
    %v2131 = vunpack.c.l.b16 %v2081
    %v2132 = vunpack.c.l.b16 %v2082
    %v2133 = vunpack.c.l.b16 %v2083
    %v2134 = vunpack.c.l.b16 %v2084
    %v2135 = vunpack.c.l.b16 %v2085
    %v2136 = vunpack.c.l.b16 %v2086
    %v2137 = vunpack.c.l.b16 %v2087
    %v2138 = vunpack.c.l.b16 %v2088
    %v2139 = vunpack.c.l.b16 %v2089
    %v2140 = vunpack.c.l.b16 %v2090
    %v2141 = vunpack.c.l.b16 %v2091
    %v2142 = vunpack.c.l.b16 %v2092
    %v2143 = vunpack.c.l.b16 %v2093
    %v2144 = vunpack.c.l.b16 %v2094
    %v2145 = vunpack.c.l.b16 %v2095
    %v2146 = vpack.c.b16 %v2131, %v2130
    %v2147 = vpack.c.b16 %v2133, %v2132
    %v2148 = vpack.c.b16 %v2135, %v2134
    %v2149 = vpack.c.b16 %v2137, %v2136
    %v2150 = vpack.c.b16 %v2139, %v2138
    %v2151 = vpack.c.b16 %v2141, %v2140
    %v2152 = vpack.c.b16 %v2143, %v2142
    %v2153 = vpack.c.b16 %v2145, %v2144
    %2162 = vmatpush.bf16.msra.mxu0 %v2153
    %2163 = vmatpush.bf16.msra.mxu0 %v2152
    %2164 = vmatpush.bf16.msra.mxu0 %v2151
    %2165 = vmatpush.bf16.msra.mxu0 %v2150
    %2166 = vmatpush.bf16.msra.mxu0 %v2149
    %2167 = vmatpush.bf16.msra.mxu0 %v2148
    %2168 = vmatpush.bf16.msra.mxu0 %v2147
    %2169 = vmatpush.bf16.msra.mxu0 %v2146
    %2170 = vmatmul.bf16.gmra.mxu0 %v2096
    %v2171 = vpop.f32.mrf.mxu0
    %v2172 = vadd.f32 %v2113, %v2171
    %v2173 = vpop.f32.mrf.mxu0
    %v2174 = vadd.f32 %v2113, %v2173
    %2175 = vmatmul.bf16.gmra.mxu0 %v2097
    %v2176 = vpop.f32.mrf.mxu0
    %v2177 = vadd.f32 %v2113, %v2176
    %v2178 = vpop.f32.mrf.mxu0
    %v2179 = vadd.f32 %v2113, %v2178
    %2180 = vmatmul.bf16.gmra.mxu0 %v2098
    %v2181 = vpop.f32.mrf.mxu0
    %v2182 = vadd.f32 %v2113, %v2181
    %v2183 = vpop.f32.mrf.mxu0
    %v2184 = vadd.f32 %v2113, %v2183
    %2185 = vmatmul.bf16.gmra.mxu0 %v2099
    %v2186 = vpop.f32.mrf.mxu0
    %v2187 = vadd.f32 %v2113, %v2186
    %v2188 = vpop.f32.mrf.mxu0
    %v2189 = vadd.f32 %v2113, %v2188
    %2190 = vmatmul.bf16.gmra.mxu0 %v2100
    %v2191 = vpop.f32.mrf.mxu0
    %v2192 = vadd.f32 %v2113, %v2191
    %v2193 = vpop.f32.mrf.mxu0
    %v2194 = vadd.f32 %v2113, %v2193
    %2195 = vmatmul.bf16.gmra.mxu0 %v2101
    %v2196 = vpop.f32.mrf.mxu0
    %v2197 = vadd.f32 %v2113, %v2196
    %v2198 = vpop.f32.mrf.mxu0
    %v2199 = vadd.f32 %v2113, %v2198
    %2200 = vmatmul.bf16.gmra.mxu0 %v2102
    %v2201 = vpop.f32.mrf.mxu0
    %v2202 = vadd.f32 %v2113, %v2201
    %v2203 = vpop.f32.mrf.mxu0
    %v2204 = vadd.f32 %v2113, %v2203
    %2205 = vmatmul.bf16.gmra.mxu0 %v2103
    %v2206 = vpop.f32.mrf.mxu0
    %v2207 = vadd.f32 %v2113, %v2206
    %v2208 = vpop.f32.mrf.mxu0
    %v2209 = vadd.f32 %v2113, %v2208
    %2210 = vmatmul.bf16.gmra.mxu0 %v2104
    %v2211 = vpop.f32.mrf.mxu0
    %v2212 = vadd.f32 %v2113, %v2211
    %v2213 = vpop.f32.mrf.mxu0
    %v2214 = vadd.f32 %v2113, %v2213
    %2215 = vmatmul.bf16.gmra.mxu0 %v2105
    %v2216 = vpop.f32.mrf.mxu0
    %v2217 = vadd.f32 %v2113, %v2216
    %v2218 = vpop.f32.mrf.mxu0
    %v2219 = vadd.f32 %v2113, %v2218
    %2220 = vmatmul.bf16.gmra.mxu0 %v2106
    %v2221 = vpop.f32.mrf.mxu0
    %v2222 = vadd.f32 %v2113, %v2221
    %v2223 = vpop.f32.mrf.mxu0
    %v2224 = vadd.f32 %v2113, %v2223
    %2225 = vmatmul.bf16.gmra.mxu0 %v2107
    %v2226 = vpop.f32.mrf.mxu0
    %v2227 = vadd.f32 %v2113, %v2226
    %v2228 = vpop.f32.mrf.mxu0
    %v2229 = vadd.f32 %v2113, %v2228
    %2230 = vmatmul.bf16.gmra.mxu0 %v2108
    %v2231 = vpop.f32.mrf.mxu0
    %v2232 = vadd.f32 %v2113, %v2231
    %v2233 = vpop.f32.mrf.mxu0
    %v2234 = vadd.f32 %v2113, %v2233
    %2235 = vmatmul.bf16.gmra.mxu0 %v2109
    %v2236 = vpop.f32.mrf.mxu0
    %v2237 = vadd.f32 %v2113, %v2236
    %v2238 = vpop.f32.mrf.mxu0
    %v2239 = vadd.f32 %v2113, %v2238
    %2240 = vmatmul.bf16.gmra.mxu0 %v2110
    %v2241 = vpop.f32.mrf.mxu0
    %v2242 = vadd.f32 %v2113, %v2241
    %v2243 = vpop.f32.mrf.mxu0
    %v2244 = vadd.f32 %v2113, %v2243
    %2245 = vmatmul.bf16.gmra.mxu0 %v2111
    %v2246 = vpop.f32.mrf.mxu0
    %v2247 = vadd.f32 %v2113, %v2246
    %v2248 = vpop.f32.mrf.mxu0
    %v2249 = vadd.f32 %v2113, %v2248
    %2250 = vdwg.mxu0
    %v2251 = vtanh.pop %v2172
    %v2252 = vtanh.pop %v2174
    %v2253 = vtanh.pop %v2177
    %v2254 = vtanh.pop %v2179
    %v2255 = vtanh.pop %v2182
    %v2256 = vtanh.pop %v2184
    %v2257 = vtanh.pop %v2187
    %v2258 = vtanh.pop %v2189
    %v2259 = vtanh.pop %v2192
    %v2260 = vtanh.pop %v2194
    %v2261 = vtanh.pop %v2197
    %v2262 = vtanh.pop %v2199
    %v2263 = vtanh.pop %v2202
    %v2264 = vtanh.pop %v2204
    %v2265 = vtanh.pop %v2207
    %v2266 = vtanh.pop %v2209
    %v2267 = vtanh.pop %v2212
    %v2268 = vtanh.pop %v2214
    %v2269 = vtanh.pop %v2217
    %v2270 = vtanh.pop %v2219
    %v2271 = vtanh.pop %v2222
    %v2272 = vtanh.pop %v2224
    %v2273 = vtanh.pop %v2227
    %v2274 = vtanh.pop %v2229
    %v2275 = vtanh.pop %v2232
    %v2276 = vtanh.pop %v2234
    %v2277 = vtanh.pop %v2237
    %v2278 = vtanh.pop %v2239
    %v2279 = vtanh.pop %v2242
    %v2280 = vtanh.pop %v2244
    %v2281 = vtanh.pop %v2247
    %v2282 = vtanh.pop %v2249
    %v2283 = vld [vmem:[#allocation2] sm:$0xff]
    %v2284 = vld [vmem:[#allocation2 + $0x8] sm:$0xff]
    %v2285 = vld [vmem:[#allocation2 + $0x10] sm:$0xff]
    %v2286 = vld [vmem:[#allocation2 + $0x18] sm:$0xff]
    %v2287 = vld [vmem:[#allocation2 + $0x20] sm:$0xff]
    %v2288 = vld [vmem:[#allocation2 + $0x28] sm:$0xff]
    %v2289 = vld [vmem:[#allocation2 + $0x30] sm:$0xff]
    %v2290 = vld [vmem:[#allocation2 + $0x38] sm:$0xff]
    %v2291 = vld [vmem:[#allocation2 + $0x40] sm:$0xff]
    %v2292 = vld [vmem:[#allocation2 + $0x48] sm:$0xff]
    %v2293 = vld [vmem:[#allocation2 + $0x50] sm:$0xff]
    %v2294 = vld [vmem:[#allocation2 + $0x58] sm:$0xff]
    %v2295 = vld [vmem:[#allocation2 + $0x60] sm:$0xff]
    %v2296 = vld [vmem:[#allocation2 + $0x68] sm:$0xff]
    %v2297 = vld [vmem:[#allocation2 + $0x70] sm:$0xff]
    %v2298 = vld [vmem:[#allocation2 + $0x78] sm:$0xff]
    %v2299 = vld [vmem:[#allocation2 + $0x80] sm:$0xff]
    %v2300 = vld [vmem:[#allocation2 + $0x88] sm:$0xff]
    %v2301 = vld [vmem:[#allocation2 + $0x90] sm:$0xff]
    %v2302 = vld [vmem:[#allocation2 + $0x98] sm:$0xff]
    %v2303 = vld [vmem:[#allocation2 + $0xa0] sm:$0xff]
    %v2304 = vld [vmem:[#allocation2 + $0xa8] sm:$0xff]
    %v2305 = vld [vmem:[#allocation2 + $0xb0] sm:$0xff]
    %v2306 = vld [vmem:[#allocation2 + $0xb8] sm:$0xff]
    %v2307 = vld [vmem:[#allocation2 + $0xc0] sm:$0xff]
    %v2308 = vld [vmem:[#allocation2 + $0xc8] sm:$0xff]
    %v2309 = vld [vmem:[#allocation2 + $0xd0] sm:$0xff]
    %v2310 = vld [vmem:[#allocation2 + $0xd8] sm:$0xff]
    %v2311 = vld [vmem:[#allocation2 + $0xe0] sm:$0xff]
    %v2312 = vld [vmem:[#allocation2 + $0xe8] sm:$0xff]
    %v2313 = vld [vmem:[#allocation2 + $0xf0] sm:$0xff]
    %v2314 = vld [vmem:[#allocation2 + $0xf8] sm:$0xff]
    %v2315 = vadd.f32 %v2283, %v2251
    %v2316 = vadd.f32 %v2284, %v2252
    %v2317 = vadd.f32 %v2285, %v2253
    %v2318 = vadd.f32 %v2286, %v2254
    %v2319 = vadd.f32 %v2287, %v2255
    %v2320 = vadd.f32 %v2288, %v2256
    %v2321 = vadd.f32 %v2289, %v2257
    %v2322 = vadd.f32 %v2290, %v2258
    %v2323 = vadd.f32 %v2291, %v2259
    %v2324 = vadd.f32 %v2292, %v2260
    %v2325 = vadd.f32 %v2293, %v2261
    %v2326 = vadd.f32 %v2294, %v2262
    %v2327 = vadd.f32 %v2295, %v2263
    %v2328 = vadd.f32 %v2296, %v2264
    %v2329 = vadd.f32 %v2297, %v2265
    %v2330 = vadd.f32 %v2298, %v2266
    %v2331 = vadd.f32 %v2299, %v2267
    %v2332 = vadd.f32 %v2300, %v2268
    %v2333 = vadd.f32 %v2301, %v2269
    %v2334 = vadd.f32 %v2302, %v2270
    %v2335 = vadd.f32 %v2303, %v2271
    %v2336 = vadd.f32 %v2304, %v2272
    %v2337 = vadd.f32 %v2305, %v2273
    %v2338 = vadd.f32 %v2306, %v2274
    %v2339 = vadd.f32 %v2307, %v2275
    %v2340 = vadd.f32 %v2308, %v2276
    %v2341 = vadd.f32 %v2309, %v2277
    %v2342 = vadd.f32 %v2310, %v2278
    %v2343 = vadd.f32 %v2311, %v2279
    %v2344 = vadd.f32 %v2312, %v2280
    %v2345 = vadd.f32 %v2313, %v2281
    %v2346 = vadd.f32 %v2314, %v2282
    %v2347 = vpack.c.bf16 %v2315, %v2315
    %v2348 = vpack.c.bf16 %v2316, %v2316
    %v2349 = vpack.c.bf16 %v2317, %v2317
    %v2350 = vpack.c.bf16 %v2318, %v2318
    %v2351 = vpack.c.bf16 %v2319, %v2319
    %v2352 = vpack.c.bf16 %v2320, %v2320
    %v2353 = vpack.c.bf16 %v2321, %v2321
    %v2354 = vpack.c.bf16 %v2322, %v2322
    %v2355 = vpack.c.bf16 %v2323, %v2323
    %v2356 = vpack.c.bf16 %v2324, %v2324
    %v2357 = vpack.c.bf16 %v2325, %v2325
    %v2358 = vpack.c.bf16 %v2326, %v2326
    %v2359 = vpack.c.bf16 %v2327, %v2327
    %v2360 = vpack.c.bf16 %v2328, %v2328
    %v2361 = vpack.c.bf16 %v2329, %v2329
    %v2362 = vpack.c.bf16 %v2330, %v2330
    %v2363 = vpack.c.bf16 %v2331, %v2331
    %v2364 = vpack.c.bf16 %v2332, %v2332
    %v2365 = vpack.c.bf16 %v2333, %v2333
    %v2366 = vpack.c.bf16 %v2334, %v2334
    %v2367 = vpack.c.bf16 %v2335, %v2335
    %v2368 = vpack.c.bf16 %v2336, %v2336
    %v2369 = vpack.c.bf16 %v2337, %v2337
    %v2370 = vpack.c.bf16 %v2338, %v2338
    %v2371 = vpack.c.bf16 %v2339, %v2339
    %v2372 = vpack.c.bf16 %v2340, %v2340
    %v2373 = vpack.c.bf16 %v2341, %v2341
    %v2374 = vpack.c.bf16 %v2342, %v2342
    %v2375 = vpack.c.bf16 %v2343, %v2343
    %v2376 = vpack.c.bf16 %v2344, %v2344
    %v2377 = vpack.c.bf16 %v2345, %v2345
    %v2378 = vpack.c.bf16 %v2346, %v2346
    %2379 = vst [vmem:[#allocation12] sm:$0xf] %v2347
    %2380 = vst [vmem:[#allocation12 + $0x4] sm:$0xf] %v2348
    %2381 = vst [vmem:[#allocation12 + $0x8] sm:$0xf] %v2349
    %2382 = vst [vmem:[#allocation12 + $0xc] sm:$0xf] %v2350
    %2383 = vst [vmem:[#allocation12 + $0x10] sm:$0xf] %v2351
    %2384 = vst [vmem:[#allocation12 + $0x14] sm:$0xf] %v2352
    %2385 = vst [vmem:[#allocation12 + $0x18] sm:$0xf] %v2353
    %2386 = vst [vmem:[#allocation12 + $0x1c] sm:$0xf] %v2354
    %2387 = vst [vmem:[#allocation12 + $0x20] sm:$0xf] %v2355
    %2388 = vst [vmem:[#allocation12 + $0x24] sm:$0xf] %v2356
    %2389 = vst [vmem:[#allocation12 + $0x28] sm:$0xf] %v2357
    %2390 = vst [vmem:[#allocation12 + $0x2c] sm:$0xf] %v2358
    %2391 = vst [vmem:[#allocation12 + $0x30] sm:$0xf] %v2359
    %2392 = vst [vmem:[#allocation12 + $0x34] sm:$0xf] %v2360
    %2393 = vst [vmem:[#allocation12 + $0x38] sm:$0xf] %v2361
    %2394 = vst [vmem:[#allocation12 + $0x3c] sm:$0xf] %v2362
    %2395 = vst [vmem:[#allocation12 + $0x40] sm:$0xf] %v2363
    %2396 = vst [vmem:[#allocation12 + $0x44] sm:$0xf] %v2364
    %2397 = vst [vmem:[#allocation12 + $0x48] sm:$0xf] %v2365
    %2398 = vst [vmem:[#allocation12 + $0x4c] sm:$0xf] %v2366
    %2399 = vst [vmem:[#allocation12 + $0x50] sm:$0xf] %v2367
    %2400 = vst [vmem:[#allocation12 + $0x54] sm:$0xf] %v2368
    %2401 = vst [vmem:[#allocation12 + $0x58] sm:$0xf] %v2369
    %2402 = vst [vmem:[#allocation12 + $0x5c] sm:$0xf] %v2370
    %2403 = vst [vmem:[#allocation12 + $0x60] sm:$0xf] %v2371
    %2404 = vst [vmem:[#allocation12 + $0x64] sm:$0xf] %v2372
    %2405 = vst [vmem:[#allocation12 + $0x68] sm:$0xf] %v2373
    %2406 = vst [vmem:[#allocation12 + $0x6c] sm:$0xf] %v2374
    %2407 = vst [vmem:[#allocation12 + $0x70] sm:$0xf] %v2375
    %2408 = vst [vmem:[#allocation12 + $0x74] sm:$0xf] %v2376
    %2409 = vst [vmem:[#allocation12 + $0x78] sm:$0xf] %v2377
    %2410 = vst [vmem:[#allocation12 + $0x7c] sm:$0xf] %v2378
    // Predicated region
    $region42: #{tpu_custom_call.1} parent=1 // pred_check
      _
    $region43: #{tpu_custom_call.1} parent=1 // pred_check_branch
      %2412 = sbr.rel (0) target = $region45
    $region44: #{tpu_custom_call.1} parent=1 // pred_region
      %2414 = vsyncadd [#allocation5], 0
      %s2415 = sshll.u32 [#allocation12], 4
      %s2416 = int_to_ptr.vmem [resolvable:$true] %s2415
      %s2417 = sshll.u32 %s5, 4
      %s2418 = int_to_ptr.hbm [resolvable:$true] %s2417
      %2423 = dma.vmem_to_hbm [thread:$0]  %s2416, 2048, %s2418, [#allocation5], 64, 64, 4
    $region45: #{tpu_custom_call.1} parent=1 // pred_fallthru
      _
    // Predicated region
    $region46: #{tpu_custom_call.1} parent=1 // pred_check
      _
    $region47: #{tpu_custom_call.1} parent=1 // pred_check_branch
      %2425 = sbr.rel (0) target = $region49
    $region48: #{tpu_custom_call.1} parent=1 // pred_region
      %2427 = dma.done [#allocation5], 2048
    $region49: #{tpu_custom_call.1} parent=1 // pred_fallthru
      _
    %2428 = vsyncpa [#allocation4], 1
    %2429 = vsyncpa [#allocation7], 1
    %2430 = vsyncpa [#allocation10], 1
    %2431 = vsyncpa [#allocation5], 1

</llo_original>
